<compile_context>
chip_gen: v7x
topology: tpu7x:2x2x1
jax: 0.10.0
libtpu: 0.0.40
codegen_flags: <defaults>
</compile_context>

<pallas_src>
import jax
import jax.numpy as jnp
from jax.experimental import pallas as pl
from jax.experimental.pallas import tpu as pltpu

LANE = 128
GATHER_UNROLL = 8


def _round_up(n, m):
    return (n + m - 1) // m * m


def _default_tile_b():
    """128-row tiles for v2-v5 class chips (128x128 MXU), 256 for v6e/v7x."""
    try:
        kind = jax.devices()[0].device_kind.lower()
    except Exception:
        return 128
    if any(v in kind for v in ("v2", "v3", "v4", "v5")):
        return 128
    return 256


def neumf_kernel(ids_ref,          # SMEM [2, Bp] int32 (scalar prefetch)
                 vals_ref,         # VMEM [TB, 2]  f32
                 tab_ref,          # VMEM [F, Fp]  f32 fused table [gmf|mlp|0]
                 w1_ref, b1_ref,   # VMEM [2*Fp, Hp], [1, Hp]
                 w2_ref, b2_ref,   # VMEM [Hp, H2p], [1, H2p]
                 w3_ref, b3_ref,   # VMEM [Fp+H2p, 128], [1, 128]
                 out_ref,          # VMEM [TB, 128] f32 (col 0 is the result)
                 s0, s1):          # VMEM scratch [TB, Fp] f32
    tb = out_ref.shape[0]
    base = pl.program_id(0) * tb

    # ---- Embedding gather: fused table -> 2 row copies per sample, with an
    # explicit 8-way unrolled body so copies interleave across rows. ----
    def gather_rows(g, carry):
        b0 = g * GATHER_UNROLL
        for u in range(GATHER_UNROLL):      # static -> unrolled in loop body
            b = b0 + u
            i0 = ids_ref[0, base + b]
            i1 = ids_ref[1, base + b]
            s0[pl.ds(b, 1), :] = tab_ref[pl.ds(i0, 1), :]
            s1[pl.ds(b, 1), :] = tab_ref[pl.ds(i1, 1), :]
        return carry

    jax.lax.fori_loop(0, tb // GATHER_UNROLL, gather_rows, 0)

    v0 = vals_ref[:, 0:1]                    # [TB, 1]
    v1 = vals_ref[:, 1:2]

    x0 = s0[...] * v0                        # [TB,Fp] = [v0*gmf0 | v0*mlp0 | 0]
    x1 = s1[...] * v1                        # [TB,Fp] = [v1*gmf1 | v1*mlp1 | 0]

    # GMF product: lanes 0:D hold (v0*gmf0)*(v1*gmf1); lanes D:2D hold an
    # mlp*mlp junk product that the zero rows of w3 annihilate.
    prod = x0 * x1                           # [TB, Fp]

    # MLP branch: one packed fc1 matmul over [x0 | x1].
    xcat = jnp.concatenate([x0, x1], axis=1)                      # [TB, 2*Fp]
    h = jnp.dot(xcat, w1_ref[...], preferred_element_type=jnp.float32)
    h = jnp.maximum(h + b1_ref[...], 0.0)                         # [TB, Hp]
    h2 = jnp.dot(h, w2_ref[...], preferred_element_type=jnp.float32)
    h2 = jnp.maximum(h2 + b2_ref[...], 0.0)                       # [TB, H2p]

    # fc3: one packed matmul over [gmf_prod | h2]; N padded to 128 lanes so
    # the output store is a lane-dense unmasked vst.
    ycat = jnp.concatenate([prod, h2], axis=1)                    # [TB, Fp+H2p]
    out = jnp.dot(ycat, w3_ref[...], preferred_element_type=jnp.float32)
    out_ref[...] = out + b3_ref[...]


def prepare_neumf_params(params, dtype=jnp.float32):
    """One-time padding/packing of NeuMF params for the Pallas kernel
    (hoisted out of the per-call forward)."""
    gmf_tab, mlp_tab, w1, b1, w2, b2, w3, b3 = params
    num_feat, emb_d = gmf_tab.shape
    hidden = w1.shape[1]
    hidden2 = w2.shape[1]

    fp = _round_up(2 * emb_d, LANE)     # fused-row lane width
    hp = _round_up(hidden, LANE)
    h2p = _round_up(hidden2, LANE)

    # Fused embedding table [F, fp] = [gmf | mlp | 0].
    tab = jnp.zeros((num_feat, fp), dtype)
    tab = tab.at[:, :emb_d].set(gmf_tab.astype(dtype))
    tab = tab.at[:, emb_d:2 * emb_d].set(mlp_tab.astype(dtype))

    # fc1 packed for one matmul on [x0 | x1]: the mlp part of field 0 sits in
    # lanes emb_d:2*emb_d of x0, field 1 in the same lanes of x1 (offset fp).
    w1p = jnp.zeros((2 * fp, hp), dtype)
    w1p = w1p.at[emb_d:2 * emb_d, :hidden].set(w1[:emb_d].astype(dtype))
    w1p = w1p.at[fp + emb_d:fp + 2 * emb_d, :hidden].set(w1[emb_d:].astype(dtype))
    b1p = jnp.zeros((1, hp), dtype).at[0, :hidden].set(b1.astype(dtype))

    w2p = jnp.zeros((hp, h2p), dtype).at[:hidden, :hidden2].set(w2.astype(dtype))
    b2p = jnp.zeros((1, h2p), dtype).at[0, :hidden2].set(b2.astype(dtype))

    # fc3 packed for one matmul on [prod | h2]; rows emb_d:fp stay zero to
    # kill the junk lanes of prod.  Only column 0 is the real output.
    w3p = jnp.zeros((fp + h2p, LANE), dtype)
    w3p = w3p.at[:emb_d, 0].set(w3[:emb_d, 0].astype(dtype))
    w3p = w3p.at[fp:fp + hidden2, 0].set(w3[emb_d:, 0].astype(dtype))
    b3p = jnp.zeros((1, LANE), dtype).at[0, 0].set(b3[0].astype(dtype))

    return dict(tab=tab, w1=w1p, b1=b1p, w2=w2p, b2=b2p, w3=w3p, b3=b3p)


def neumf_forward(feature_ids, feature_vals, packed, *, tile_b=None):
    """feature_ids [B,2] int, feature_vals [B,2] f32 -> [B] f32."""
    tab = packed["tab"]
    w1p, b1p = packed["w1"], packed["b1"]
    w2p, b2p = packed["w2"], packed["b2"]
    w3p, b3p = packed["w3"], packed["b3"]

    num_feat, fp = tab.shape
    hp = w1p.shape[1]
    h2p = w2p.shape[1]

    if tile_b is None:
        tile_b = _default_tile_b()

    bsz = feature_ids.shape[0]
    bp = _round_up(bsz, tile_b)

    # Clamp untrusted ids (OOB VMEM reads are silent on TPU) and pad the batch
    # to whole tiles (padded rows: id 0 / val 0, discarded by the final slice).
    ids = jnp.clip(feature_ids.astype(jnp.int32), 0, num_feat - 1)
    ids_p = jnp.zeros((bp, 2), jnp.int32).at[:bsz].set(ids)
    vals_p = jnp.zeros((bp, 2), jnp.float32).at[:bsz].set(
        feature_vals.astype(jnp.float32))
    ids_t = ids_p.T          # [2, Bp]: long axis last -> compact SMEM layout

    num_tiles = bp // tile_b
    const = lambda i, ids: (0, 0)

    grid_spec = pltpu.PrefetchScalarGridSpec(
        num_scalar_prefetch=1,
        grid=(num_tiles,),
        in_specs=[
            pl.BlockSpec((tile_b, 2), lambda i, ids: (i, 0)),   # feature_vals
            pl.BlockSpec((num_feat, fp), const),                # fused table
            pl.BlockSpec((2 * fp, hp), const),                  # fc1 packed
            pl.BlockSpec((1, hp), const),                       # b1
            pl.BlockSpec((hp, h2p), const),                     # fc2
            pl.BlockSpec((1, h2p), const),                      # b2
            pl.BlockSpec((fp + h2p, LANE), const),              # fc3 packed
            pl.BlockSpec((1, LANE), const),                     # b3
        ],
        out_specs=pl.BlockSpec((tile_b, LANE), lambda i, ids: (i, 0)),
        scratch_shapes=[pltpu.VMEM((tile_b, fp), jnp.float32)] * 2,
    )

    out = pl.pallas_call(
        neumf_kernel,
        out_shape=jax.ShapeDtypeStruct((bp, LANE), jnp.float32),
        grid_spec=grid_spec,
        compiler_params=pltpu.CompilerParams(
            dimension_semantics=("parallel",)),
    )(ids_t, vals_p, tab, w1p, b1p, w2p, b2p, w3p, b3p)

    # torch: output.squeeze() -> [B]
    return out[:bsz, 0]


if __name__ == "__main__":
    batch = 200                 # deliberately not a multiple of the batch tile
    num_features = 500
    embedding_dim = 32
    num_fields = 2
    hidden = 128

    key = jax.random.PRNGKey(0)
    ks = jax.random.split(key, 10)

    def xavier(k, shape):
        std = (2.0 / (shape[0] + shape[1])) ** 0.5
        return jax.random.normal(k, shape, jnp.float32) * std

    gmf_tab = xavier(ks[0], (num_features, embedding_dim))
    mlp_tab = xavier(ks[1], (num_features, embedding_dim))
    w1 = xavier(ks[2], (num_fields * embedding_dim, hidden))
    b1 = 0.01 * jax.random.normal(ks[3], (hidden,), jnp.float32)
    w2 = xavier(ks[4], (hidden, hidden // 2))
    b2 = 0.01 * jax.random.normal(ks[5], (hidden // 2,), jnp.float32)
    w3 = xavier(ks[6], (embedding_dim + hidden // 2, 1))
    b3 = 0.01 * jax.random.normal(ks[7], (1,), jnp.float32)

    feature_ids = jax.random.randint(
        ks[8], (batch, num_fields), 0, num_features, dtype=jnp.int32)
    feature_vals = jax.random.uniform(
        ks[9], (batch, num_fields), jnp.float32, 0.5, 1.5)

    params = (gmf_tab, mlp_tab, w1, b1, w2, b2, w3, b3)
    packed = prepare_neumf_params(params)          # one-time pack (hoisted)
    out = neumf_forward(feature_ids, feature_vals, packed)
    jax.block_until_ready(out)

    # Pure-JAX reference with the same (unpacked) parameters.
    e_g = gmf_tab[feature_ids] * feature_vals[:, :, None]
    out_gmf = e_g[:, 0, :] * e_g[:, 1, :]
    e_m = mlp_tab[feature_ids] * feature_vals[:, :, None]
    x = e_m.reshape(batch, num_fields * embedding_dim)
    h = jax.nn.relu(x @ w1 + b1)
    h = jax.nn.relu(h @ w2 + b2)
    ref = (jnp.concatenate([out_gmf, h], axis=1) @ w3 + b3)[:, 0]

    assert out.shape == (batch,)
    assert jnp.allclose(out, ref, atol=1e-3, rtol=1e-3), float(
        jnp.max(jnp.abs(out - ref)))
    print("KERNEL_OK")
</pallas_src>

<mosaic_0001>
module attributes {stable_mosaic.version = 11 : i64} {
  func.func @neumf_kernel(%arg0: i32, %arg1: memref<2x256xi32, #tpu.memory_space<smem>>, %arg2: memref<256x2xf32, #tpu.memory_space<vmem>>, %arg3: memref<500x128xf32, #tpu.memory_space<vmem>>, %arg4: memref<256x128xf32, #tpu.memory_space<vmem>>, %arg5: memref<1x128xf32, #tpu.memory_space<vmem>>, %arg6: memref<128x128xf32, #tpu.memory_space<vmem>>, %arg7: memref<1x128xf32, #tpu.memory_space<vmem>>, %arg8: memref<256x128xf32, #tpu.memory_space<vmem>>, %arg9: memref<1x128xf32, #tpu.memory_space<vmem>>, %arg10: memref<256x128xf32, #tpu.memory_space<vmem>>, %arg11: memref<256x128xf32, #tpu.memory_space<vmem>>, %arg12: memref<256x128xf32, #tpu.memory_space<vmem>>) attributes {dimension_semantics = [#tpu.dimension_semantics<parallel>], iteration_bounds = array<i64: 1>, scalar_prefetch = 1 : i64, scratch_operands = 2 : i64, tpu.core_type = #tpu.core_type<tc>, window_params = [{transform_indices = @transform_0, window_bounds = array<i64: 256, 2>}, {pipeline_mode = #tpu.pipeline_mode<synchronous>, transform_indices = @transform_1, window_bounds = array<i64: 500, 128>}, {pipeline_mode = #tpu.pipeline_mode<synchronous>, transform_indices = @transform_2, window_bounds = array<i64: 256, 128>}, {pipeline_mode = #tpu.pipeline_mode<synchronous>, transform_indices = @transform_3, window_bounds = array<i64: 1, 128>}, {pipeline_mode = #tpu.pipeline_mode<synchronous>, transform_indices = @transform_4, window_bounds = array<i64: 128, 128>}, {pipeline_mode = #tpu.pipeline_mode<synchronous>, transform_indices = @transform_5, window_bounds = array<i64: 1, 128>}, {pipeline_mode = #tpu.pipeline_mode<synchronous>, transform_indices = @transform_6, window_bounds = array<i64: 256, 128>}, {pipeline_mode = #tpu.pipeline_mode<synchronous>, transform_indices = @transform_7, window_bounds = array<i64: 1, 128>}, {transform_indices = @transform_8, window_bounds = array<i64: 256, 128>}]} {
    %c256_i32 = arith.constant 256 : i32
    %0 = arith.muli %arg0, %c256_i32 : i32
    %c0_i32 = arith.constant 0 : i32
    %c32_i32 = arith.constant 32 : i32
    %1 = arith.addi %c0_i32, %c32_i32 : i32
    %c1_i32 = arith.constant 1 : i32
    scf.for %arg13 = %c0_i32 to %1 step %c1_i32  : i32 {
      %c8_i32 = arith.constant 8 : i32
      %33 = arith.muli %arg13, %c8_i32 : i32
      %c0_i32_25 = arith.constant 0 : i32
      %34 = arith.addi %33, %c0_i32_25 : i32
      %35 = arith.addi %0, %34 : i32
      %c0_26 = arith.constant 0 : index
      %36 = arith.index_cast %35 : i32 to index
      %37 = memref.load %arg1[%c0_26, %36] : memref<2x256xi32, #tpu.memory_space<smem>>
      %38 = arith.addi %0, %34 : i32
      %c1_27 = arith.constant 1 : index
      %39 = arith.index_cast %38 : i32 to index
      %40 = memref.load %arg1[%c1_27, %39] : memref<2x256xi32, #tpu.memory_space<smem>>
      %41 = arith.index_cast %37 : i32 to index
      %c0_28 = arith.constant 0 : index
      %42 = vector.load %arg3[%41, %c0_28] : memref<500x128xf32, #tpu.memory_space<vmem>>, vector<1x128xf32>
      %43 = arith.index_cast %34 : i32 to index
      %c0_29 = arith.constant 0 : index
      %44 = vector.load %arg11[%43, %c0_29] : memref<256x128xf32, #tpu.memory_space<vmem>>, vector<1x128xf32>
      tpu.vector_store %arg11[%43, %c0_29], %42 {strides = array<i32>} : memref<256x128xf32, #tpu.memory_space<vmem>>, vector<1x128xf32>,
      %45 = arith.index_cast %40 : i32 to index
      %c0_30 = arith.constant 0 : index
      %46 = vector.load %arg3[%45, %c0_30] : memref<500x128xf32, #tpu.memory_space<vmem>>, vector<1x128xf32>
      %47 = arith.index_cast %34 : i32 to index
      %c0_31 = arith.constant 0 : index
      %48 = vector.load %arg12[%47, %c0_31] : memref<256x128xf32, #tpu.memory_space<vmem>>, vector<1x128xf32>
      tpu.vector_store %arg12[%47, %c0_31], %46 {strides = array<i32>} : memref<256x128xf32, #tpu.memory_space<vmem>>, vector<1x128xf32>,
      %c1_i32_32 = arith.constant 1 : i32
      %49 = arith.addi %33, %c1_i32_32 : i32
      %50 = arith.addi %0, %49 : i32
      %c0_33 = arith.constant 0 : index
      %51 = arith.index_cast %50 : i32 to index
      %52 = memref.load %arg1[%c0_33, %51] : memref<2x256xi32, #tpu.memory_space<smem>>
      %53 = arith.addi %0, %49 : i32
      %c1_34 = arith.constant 1 : index
      %54 = arith.index_cast %53 : i32 to index
      %55 = memref.load %arg1[%c1_34, %54] : memref<2x256xi32, #tpu.memory_space<smem>>
      %56 = arith.index_cast %52 : i32 to index
      %c0_35 = arith.constant 0 : index
      %57 = vector.load %arg3[%56, %c0_35] : memref<500x128xf32, #tpu.memory_space<vmem>>, vector<1x128xf32>
      %58 = arith.index_cast %49 : i32 to index
      %c0_36 = arith.constant 0 : index
      %59 = vector.load %arg11[%58, %c0_36] : memref<256x128xf32, #tpu.memory_space<vmem>>, vector<1x128xf32>
      tpu.vector_store %arg11[%58, %c0_36], %57 {strides = array<i32>} : memref<256x128xf32, #tpu.memory_space<vmem>>, vector<1x128xf32>,
      %60 = arith.index_cast %55 : i32 to index
      %c0_37 = arith.constant 0 : index
      %61 = vector.load %arg3[%60, %c0_37] : memref<500x128xf32, #tpu.memory_space<vmem>>, vector<1x128xf32>
      %62 = arith.index_cast %49 : i32 to index
      %c0_38 = arith.constant 0 : index
      %63 = vector.load %arg12[%62, %c0_38] : memref<256x128xf32, #tpu.memory_space<vmem>>, vector<1x128xf32>
      tpu.vector_store %arg12[%62, %c0_38], %61 {strides = array<i32>} : memref<256x128xf32, #tpu.memory_space<vmem>>, vector<1x128xf32>,
      %c2_i32 = arith.constant 2 : i32
      %64 = arith.addi %33, %c2_i32 : i32
      %65 = arith.addi %0, %64 : i32
      %c0_39 = arith.constant 0 : index
      %66 = arith.index_cast %65 : i32 to index
      %67 = memref.load %arg1[%c0_39, %66] : memref<2x256xi32, #tpu.memory_space<smem>>
      %68 = arith.addi %0, %64 : i32
      %c1_40 = arith.constant 1 : index
      %69 = arith.index_cast %68 : i32 to index
      %70 = memref.load %arg1[%c1_40, %69] : memref<2x256xi32, #tpu.memory_space<smem>>
      %71 = arith.index_cast %67 : i32 to index
      %c0_41 = arith.constant 0 : index
      %72 = vector.load %arg3[%71, %c0_41] : memref<500x128xf32, #tpu.memory_space<vmem>>, vector<1x128xf32>
      %73 = arith.index_cast %64 : i32 to index
      %c0_42 = arith.constant 0 : index
      %74 = vector.load %arg11[%73, %c0_42] : memref<256x128xf32, #tpu.memory_space<vmem>>, vector<1x128xf32>
      tpu.vector_store %arg11[%73, %c0_42], %72 {strides = array<i32>} : memref<256x128xf32, #tpu.memory_space<vmem>>, vector<1x128xf32>,
      %75 = arith.index_cast %70 : i32 to index
      %c0_43 = arith.constant 0 : index
      %76 = vector.load %arg3[%75, %c0_43] : memref<500x128xf32, #tpu.memory_space<vmem>>, vector<1x128xf32>
      %77 = arith.index_cast %64 : i32 to index
      %c0_44 = arith.constant 0 : index
      %78 = vector.load %arg12[%77, %c0_44] : memref<256x128xf32, #tpu.memory_space<vmem>>, vector<1x128xf32>
      tpu.vector_store %arg12[%77, %c0_44], %76 {strides = array<i32>} : memref<256x128xf32, #tpu.memory_space<vmem>>, vector<1x128xf32>,
      %c3_i32 = arith.constant 3 : i32
      %79 = arith.addi %33, %c3_i32 : i32
      %80 = arith.addi %0, %79 : i32
      %c0_45 = arith.constant 0 : index
      %81 = arith.index_cast %80 : i32 to index
      %82 = memref.load %arg1[%c0_45, %81] : memref<2x256xi32, #tpu.memory_space<smem>>
      %83 = arith.addi %0, %79 : i32
      %c1_46 = arith.constant 1 : index
      %84 = arith.index_cast %83 : i32 to index
      %85 = memref.load %arg1[%c1_46, %84] : memref<2x256xi32, #tpu.memory_space<smem>>
      %86 = arith.index_cast %82 : i32 to index
      %c0_47 = arith.constant 0 : index
      %87 = vector.load %arg3[%86, %c0_47] : memref<500x128xf32, #tpu.memory_space<vmem>>, vector<1x128xf32>
      %88 = arith.index_cast %79 : i32 to index
      %c0_48 = arith.constant 0 : index
      %89 = vector.load %arg11[%88, %c0_48] : memref<256x128xf32, #tpu.memory_space<vmem>>, vector<1x128xf32>
      tpu.vector_store %arg11[%88, %c0_48], %87 {strides = array<i32>} : memref<256x128xf32, #tpu.memory_space<vmem>>, vector<1x128xf32>,
      %90 = arith.index_cast %85 : i32 to index
      %c0_49 = arith.constant 0 : index
      %91 = vector.load %arg3[%90, %c0_49] : memref<500x128xf32, #tpu.memory_space<vmem>>, vector<1x128xf32>
      %92 = arith.index_cast %79 : i32 to index
      %c0_50 = arith.constant 0 : index
      %93 = vector.load %arg12[%92, %c0_50] : memref<256x128xf32, #tpu.memory_space<vmem>>, vector<1x128xf32>
      tpu.vector_store %arg12[%92, %c0_50], %91 {strides = array<i32>} : memref<256x128xf32, #tpu.memory_space<vmem>>, vector<1x128xf32>,
      %c4_i32 = arith.constant 4 : i32
      %94 = arith.addi %33, %c4_i32 : i32
      %95 = arith.addi %0, %94 : i32
      %c0_51 = arith.constant 0 : index
      %96 = arith.index_cast %95 : i32 to index
      %97 = memref.load %arg1[%c0_51, %96] : memref<2x256xi32, #tpu.memory_space<smem>>
      %98 = arith.addi %0, %94 : i32
      %c1_52 = arith.constant 1 : index
      %99 = arith.index_cast %98 : i32 to index
      %100 = memref.load %arg1[%c1_52, %99] : memref<2x256xi32, #tpu.memory_space<smem>>
      %101 = arith.index_cast %97 : i32 to index
      %c0_53 = arith.constant 0 : index
      %102 = vector.load %arg3[%101, %c0_53] : memref<500x128xf32, #tpu.memory_space<vmem>>, vector<1x128xf32>
      %103 = arith.index_cast %94 : i32 to index
      %c0_54 = arith.constant 0 : index
      %104 = vector.load %arg11[%103, %c0_54] : memref<256x128xf32, #tpu.memory_space<vmem>>, vector<1x128xf32>
      tpu.vector_store %arg11[%103, %c0_54], %102 {strides = array<i32>} : memref<256x128xf32, #tpu.memory_space<vmem>>, vector<1x128xf32>,
      %105 = arith.index_cast %100 : i32 to index
      %c0_55 = arith.constant 0 : index
      %106 = vector.load %arg3[%105, %c0_55] : memref<500x128xf32, #tpu.memory_space<vmem>>, vector<1x128xf32>
      %107 = arith.index_cast %94 : i32 to index
      %c0_56 = arith.constant 0 : index
      %108 = vector.load %arg12[%107, %c0_56] : memref<256x128xf32, #tpu.memory_space<vmem>>, vector<1x128xf32>
      tpu.vector_store %arg12[%107, %c0_56], %106 {strides = array<i32>} : memref<256x128xf32, #tpu.memory_space<vmem>>, vector<1x128xf32>,
      %c5_i32 = arith.constant 5 : i32
      %109 = arith.addi %33, %c5_i32 : i32
      %110 = arith.addi %0, %109 : i32
      %c0_57 = arith.constant 0 : index
      %111 = arith.index_cast %110 : i32 to index
      %112 = memref.load %arg1[%c0_57, %111] : memref<2x256xi32, #tpu.memory_space<smem>>
      %113 = arith.addi %0, %109 : i32
      %c1_58 = arith.constant 1 : index
      %114 = arith.index_cast %113 : i32 to index
      %115 = memref.load %arg1[%c1_58, %114] : memref<2x256xi32, #tpu.memory_space<smem>>
      %116 = arith.index_cast %112 : i32 to index
      %c0_59 = arith.constant 0 : index
      %117 = vector.load %arg3[%116, %c0_59] : memref<500x128xf32, #tpu.memory_space<vmem>>, vector<1x128xf32>
      %118 = arith.index_cast %109 : i32 to index
      %c0_60 = arith.constant 0 : index
      %119 = vector.load %arg11[%118, %c0_60] : memref<256x128xf32, #tpu.memory_space<vmem>>, vector<1x128xf32>
      tpu.vector_store %arg11[%118, %c0_60], %117 {strides = array<i32>} : memref<256x128xf32, #tpu.memory_space<vmem>>, vector<1x128xf32>,
      %120 = arith.index_cast %115 : i32 to index
      %c0_61 = arith.constant 0 : index
      %121 = vector.load %arg3[%120, %c0_61] : memref<500x128xf32, #tpu.memory_space<vmem>>, vector<1x128xf32>
      %122 = arith.index_cast %109 : i32 to index
      %c0_62 = arith.constant 0 : index
      %123 = vector.load %arg12[%122, %c0_62] : memref<256x128xf32, #tpu.memory_space<vmem>>, vector<1x128xf32>
      tpu.vector_store %arg12[%122, %c0_62], %121 {strides = array<i32>} : memref<256x128xf32, #tpu.memory_space<vmem>>, vector<1x128xf32>,
      %c6_i32 = arith.constant 6 : i32
      %124 = arith.addi %33, %c6_i32 : i32
      %125 = arith.addi %0, %124 : i32
      %c0_63 = arith.constant 0 : index
      %126 = arith.index_cast %125 : i32 to index
      %127 = memref.load %arg1[%c0_63, %126] : memref<2x256xi32, #tpu.memory_space<smem>>
      %128 = arith.addi %0, %124 : i32
      %c1_64 = arith.constant 1 : index
      %129 = arith.index_cast %128 : i32 to index
      %130 = memref.load %arg1[%c1_64, %129] : memref<2x256xi32, #tpu.memory_space<smem>>
      %131 = arith.index_cast %127 : i32 to index
      %c0_65 = arith.constant 0 : index
      %132 = vector.load %arg3[%131, %c0_65] : memref<500x128xf32, #tpu.memory_space<vmem>>, vector<1x128xf32>
      %133 = arith.index_cast %124 : i32 to index
      %c0_66 = arith.constant 0 : index
      %134 = vector.load %arg11[%133, %c0_66] : memref<256x128xf32, #tpu.memory_space<vmem>>, vector<1x128xf32>
      tpu.vector_store %arg11[%133, %c0_66], %132 {strides = array<i32>} : memref<256x128xf32, #tpu.memory_space<vmem>>, vector<1x128xf32>,
      %135 = arith.index_cast %130 : i32 to index
      %c0_67 = arith.constant 0 : index
      %136 = vector.load %arg3[%135, %c0_67] : memref<500x128xf32, #tpu.memory_space<vmem>>, vector<1x128xf32>
      %137 = arith.index_cast %124 : i32 to index
      %c0_68 = arith.constant 0 : index
      %138 = vector.load %arg12[%137, %c0_68] : memref<256x128xf32, #tpu.memory_space<vmem>>, vector<1x128xf32>
      tpu.vector_store %arg12[%137, %c0_68], %136 {strides = array<i32>} : memref<256x128xf32, #tpu.memory_space<vmem>>, vector<1x128xf32>,
      %c7_i32 = arith.constant 7 : i32
      %139 = arith.addi %33, %c7_i32 : i32
      %140 = arith.addi %0, %139 : i32
      %c0_69 = arith.constant 0 : index
      %141 = arith.index_cast %140 : i32 to index
      %142 = memref.load %arg1[%c0_69, %141] : memref<2x256xi32, #tpu.memory_space<smem>>
      %143 = arith.addi %0, %139 : i32
      %c1_70 = arith.constant 1 : index
      %144 = arith.index_cast %143 : i32 to index
      %145 = memref.load %arg1[%c1_70, %144] : memref<2x256xi32, #tpu.memory_space<smem>>
      %146 = arith.index_cast %142 : i32 to index
      %c0_71 = arith.constant 0 : index
      %147 = vector.load %arg3[%146, %c0_71] : memref<500x128xf32, #tpu.memory_space<vmem>>, vector<1x128xf32>
      %148 = arith.index_cast %139 : i32 to index
      %c0_72 = arith.constant 0 : index
      %149 = vector.load %arg11[%148, %c0_72] : memref<256x128xf32, #tpu.memory_space<vmem>>, vector<1x128xf32>
      tpu.vector_store %arg11[%148, %c0_72], %147 {strides = array<i32>} : memref<256x128xf32, #tpu.memory_space<vmem>>, vector<1x128xf32>,
      %150 = arith.index_cast %145 : i32 to index
      %c0_73 = arith.constant 0 : index
      %151 = vector.load %arg3[%150, %c0_73] : memref<500x128xf32, #tpu.memory_space<vmem>>, vector<1x128xf32>
      %152 = arith.index_cast %139 : i32 to index
      %c0_74 = arith.constant 0 : index
      %153 = vector.load %arg12[%152, %c0_74] : memref<256x128xf32, #tpu.memory_space<vmem>>, vector<1x128xf32>
      tpu.vector_store %arg12[%152, %c0_74], %151 {strides = array<i32>} : memref<256x128xf32, #tpu.memory_space<vmem>>, vector<1x128xf32>,
    }
    %c32_i32_0 = arith.constant 32 : i32
    %c0 = arith.constant 0 : index
    %c0_1 = arith.constant 0 : index
    %2 = vector.load %arg2[%c0, %c0_1] : memref<256x2xf32, #tpu.memory_space<vmem>>, vector<256x1xf32>
    %c0_2 = arith.constant 0 : index
    %c1 = arith.constant 1 : index
    %3 = vector.load %arg2[%c0_2, %c1] : memref<256x2xf32, #tpu.memory_space<vmem>>, vector<256x1xf32>
    %c0_3 = arith.constant 0 : index
    %c0_4 = arith.constant 0 : index
    %4 = vector.load %arg11[%c0_3, %c0_4] : memref<256x128xf32, #tpu.memory_space<vmem>>, vector<256x128xf32>
    %5 = vector.broadcast %2 : vector<256x1xf32> to vector<256x128xf32>
    %6 = arith.mulf %4, %5 : vector<256x128xf32>
    %c0_5 = arith.constant 0 : index
    %c0_6 = arith.constant 0 : index
    %7 = vector.load %arg12[%c0_5, %c0_6] : memref<256x128xf32, #tpu.memory_space<vmem>>, vector<256x128xf32>
    %8 = vector.broadcast %3 : vector<256x1xf32> to vector<256x128xf32>
    %9 = arith.mulf %7, %8 : vector<256x128xf32>
    %10 = arith.mulf %6, %9 : vector<256x128xf32>
    %11 = tpu.concatenate %6, %9 in 1 : vector<256x128xf32>, vector<256x128xf32> -> vector<256x256xf32>
    %c0_7 = arith.constant 0 : index
    %c0_8 = arith.constant 0 : index
    %12 = vector.load %arg4[%c0_7, %c0_8] : memref<256x128xf32, #tpu.memory_space<vmem>>, vector<256x128xf32>
    %cst = arith.constant dense<0.000000e+00> : vector<256x128xf32>
    %13 = tpu.matmul %11, %12, %cst {dimension_numbers = #tpu.dot_dimension_numbers<[1], [0], [0], [1], [0, 0, 1, 1], [], []>} : vector<256x256xf32>, vector<256x128xf32>, vector<256x128xf32> -> vector<256x128xf32>
    %c0_9 = arith.constant 0 : index
    %c0_10 = arith.constant 0 : index
    %14 = vector.load %arg5[%c0_9, %c0_10] : memref<1x128xf32, #tpu.memory_space<vmem>>, vector<1x128xf32>
    %15 = vector.broadcast %14 : vector<1x128xf32> to vector<256x128xf32>
    %16 = arith.addf %13, %15 : vector<256x128xf32>
    %cst_11 = arith.constant 0.000000e+00 : f32
    %17 = vector.broadcast %cst_11 : f32 to vector<256x128xf32>
    %18 = arith.maximumf %16, %17 : vector<256x128xf32>
    %c0_12 = arith.constant 0 : index
    %c0_13 = arith.constant 0 : index
    %19 = vector.load %arg6[%c0_12, %c0_13] : memref<128x128xf32, #tpu.memory_space<vmem>>, vector<128x128xf32>
    %cst_14 = arith.constant dense<0.000000e+00> : vector<256x128xf32>
    %20 = tpu.matmul %18, %19, %cst_14 {dimension_numbers = #tpu.dot_dimension_numbers<[1], [0], [0], [1], [0, 0, 1, 1], [], []>} : vector<256x128xf32>, vector<128x128xf32>, vector<256x128xf32> -> vector<256x128xf32>
    %c0_15 = arith.constant 0 : index
    %c0_16 = arith.constant 0 : index
    %21 = vector.load %arg7[%c0_15, %c0_16] : memref<1x128xf32, #tpu.memory_space<vmem>>, vector<1x128xf32>
    %22 = vector.broadcast %21 : vector<1x128xf32> to vector<256x128xf32>
    %23 = arith.addf %20, %22 : vector<256x128xf32>
    %cst_17 = arith.constant 0.000000e+00 : f32
    %24 = vector.broadcast %cst_17 : f32 to vector<256x128xf32>
    %25 = arith.maximumf %23, %24 : vector<256x128xf32>
    %26 = tpu.concatenate %10, %25 in 1 : vector<256x128xf32>, vector<256x128xf32> -> vector<256x256xf32>
    %c0_18 = arith.constant 0 : index
    %c0_19 = arith.constant 0 : index
    %27 = vector.load %arg8[%c0_18, %c0_19] : memref<256x128xf32, #tpu.memory_space<vmem>>, vector<256x128xf32>
    %cst_20 = arith.constant dense<0.000000e+00> : vector<256x128xf32>
    %28 = tpu.matmul %26, %27, %cst_20 {dimension_numbers = #tpu.dot_dimension_numbers<[1], [0], [0], [1], [0, 0, 1, 1], [], []>} : vector<256x256xf32>, vector<256x128xf32>, vector<256x128xf32> -> vector<256x128xf32>
    %c0_21 = arith.constant 0 : index
    %c0_22 = arith.constant 0 : index
    %29 = vector.load %arg9[%c0_21, %c0_22] : memref<1x128xf32, #tpu.memory_space<vmem>>, vector<1x128xf32>
    %30 = vector.broadcast %29 : vector<1x128xf32> to vector<256x128xf32>
    %31 = arith.addf %28, %30 : vector<256x128xf32>
    %c0_23 = arith.constant 0 : index
    %c0_24 = arith.constant 0 : index
    %32 = vector.load %arg10[%c0_23, %c0_24] : memref<256x128xf32, #tpu.memory_space<vmem>>, vector<256x128xf32>
    tpu.vector_store %arg10[%c0_23, %c0_24], %31 {strides = array<i32>} : memref<256x128xf32, #tpu.memory_space<vmem>>, vector<256x128xf32>,
    return
  }
  func.func @transform_0(%arg0: i32, %arg1: memref<2x256xi32, #tpu.memory_space<smem>>) -> (i32, i32) {
    %c0_i32 = arith.constant 0 : i32
    %c0_i32_0 = arith.constant 0 : i32
    return %arg0, %c0_i32 : i32, i32
  }
  func.func @transform_1(%arg0: i32, %arg1: memref<2x256xi32, #tpu.memory_space<smem>>) -> (i32, i32) {
    %c0_i32 = arith.constant 0 : i32
    %c0_i32_0 = arith.constant 0 : i32
    %c0_i32_1 = arith.constant 0 : i32
    return %c0_i32, %c0_i32_0 : i32, i32
  }
  func.func @transform_2(%arg0: i32, %arg1: memref<2x256xi32, #tpu.memory_space<smem>>) -> (i32, i32) {
    %c0_i32 = arith.constant 0 : i32
    %c0_i32_0 = arith.constant 0 : i32
    %c0_i32_1 = arith.constant 0 : i32
    return %c0_i32, %c0_i32_0 : i32, i32
  }
  func.func @transform_3(%arg0: i32, %arg1: memref<2x256xi32, #tpu.memory_space<smem>>) -> (i32, i32) {
    %c0_i32 = arith.constant 0 : i32
    %c0_i32_0 = arith.constant 0 : i32
    %c0_i32_1 = arith.constant 0 : i32
    return %c0_i32, %c0_i32_0 : i32, i32
  }
  func.func @transform_4(%arg0: i32, %arg1: memref<2x256xi32, #tpu.memory_space<smem>>) -> (i32, i32) {
    %c0_i32 = arith.constant 0 : i32
    %c0_i32_0 = arith.constant 0 : i32
    %c0_i32_1 = arith.constant 0 : i32
    return %c0_i32, %c0_i32_0 : i32, i32
  }
  func.func @transform_5(%arg0: i32, %arg1: memref<2x256xi32, #tpu.memory_space<smem>>) -> (i32, i32) {
    %c0_i32 = arith.constant 0 : i32
    %c0_i32_0 = arith.constant 0 : i32
    %c0_i32_1 = arith.constant 0 : i32
    return %c0_i32, %c0_i32_0 : i32, i32
  }
  func.func @transform_6(%arg0: i32, %arg1: memref<2x256xi32, #tpu.memory_space<smem>>) -> (i32, i32) {
    %c0_i32 = arith.constant 0 : i32
    %c0_i32_0 = arith.constant 0 : i32
    %c0_i32_1 = arith.constant 0 : i32
    return %c0_i32, %c0_i32_0 : i32, i32
  }
  func.func @transform_7(%arg0: i32, %arg1: memref<2x256xi32, #tpu.memory_space<smem>>) -> (i32, i32) {
    %c0_i32 = arith.constant 0 : i32
    %c0_i32_0 = arith.constant 0 : i32
    %c0_i32_1 = arith.constant 0 : i32
    return %c0_i32, %c0_i32_0 : i32, i32
  }
  func.func @transform_8(%arg0: i32, %arg1: memref<2x256xi32, #tpu.memory_space<smem>>) -> (i32, i32) {
    %c0_i32 = arith.constant 0 : i32
    %c0_i32_0 = arith.constant 0 : i32
    return %arg0, %c0_i32 : i32, i32
  }
}

</mosaic_0001>

<llo_original>
// kernel: tpu_custom_call.1
$region0: #{tpu_custom_call.1}
  #allocation0 [shape = 'u32[]', space=smem, size = 0x4, offset = 0x4, fixed_abs, tag = 'smem constant byte address 0x4 - core index']
  #allocation1 [shape = 'u32[144,128]{1,0:T(1,128)}', space=vmem, size = 0x12000, scoped, tag = 'internal scratch']
  #allocation2 [shape = 'f32[256,128]{1,0:T(8,128)}', space=vmem, size = 0x20000, scoped, tag = 'scratch operand']
  #allocation3 [shape = 'f32[256,128]{1,0:T(8,128)}', space=vmem, size = 0x20000, scoped, tag = 'scratch operand']
  #allocation4 [shape = 's32[1]{0}', space=sflag, size = 0x4, scoped, tag = 'scoped memory for tpu_custom_call.1']
  #allocation5 [shape = 'u8[2048]{0}', space=smem, size = 0x800, scoped, tag = 'prefetched SMEM operand 0']
  %s0 = inlined_call_operand.vmem [shape: s32[2,256], index: 0, kind: input, shape index: {}]
  %s1 = inlined_call_operand.vmem [shape: f32[256,2], index: 1, kind: input, shape index: {}]
  %s2 = inlined_call_operand.hbm [shape: f32[500,128], index: 2, kind: input, shape index: {}]
  %s3 = inlined_call_operand.vmem [shape: f32[256,128], index: 3, kind: input, shape index: {}]
  %s4 = inlined_call_operand.vmem [shape: f32[1,128], index: 4, kind: input, shape index: {}]
  %s5 = inlined_call_operand.hbm [shape: f32[128,128], index: 5, kind: input, shape index: {}]
  %s6 = inlined_call_operand.vmem [shape: f32[1,128], index: 6, kind: input, shape index: {}]
  %s7 = inlined_call_operand.hbm [shape: f32[256,128], index: 7, kind: input, shape index: {}]
  %s8 = inlined_call_operand.vmem [shape: f32[1,128], index: 8, kind: input, shape index: {}]
  %s9 = inlined_call_operand.hbm [shape: f32[256,128], index: 9, kind: output, shape index: {}]
  %s10 = sld [smem:[#allocation0]]
  $region61: #{tpu_custom_call.1} parent=0
    _
  %s12 = ssub.s32 1, %s10
  %s13 = scalar_select 0, %s12, %s10
  %s14 = sshll.u32 %s0, 4
  %s15 = int_to_ptr.vmem [resolvable:$true] %s14
  %17 = dma.vmem_to_smem %s15, 64, [#allocation5], [#allocation4]
  %18 = dma.done [#allocation4], 64
  %19 = sfence
  $region1: #{tpu_custom_call.1} parent=0
    #allocation6 [shape = 'u8[258048]{0}', space=vmem, size = 0x3f000, scoped, tag = 'input window, operand 2, single buffered']
    #allocation7 [shape = 's32[1]{0}', space=sflag, size = 0x4, scoped, tag = 'scoped memory for tpu_custom_call.1']
    #allocation8 [shape = 's32[1]{0}', space=sflag, size = 0x4, scoped, tag = 'scoped memory for tpu_custom_call.1']
    #allocation9 [shape = 'u8[65536]{0}', space=vmem, size = 0x10000, scoped, tag = 'input window, operand 5, single buffered']
    #allocation10 [shape = 's32[1]{0}', space=sflag, size = 0x4, scoped, tag = 'scoped memory for tpu_custom_call.1']
    #allocation11 [shape = 'u8[131072]{0}', space=vmem, size = 0x20000, scoped, tag = 'input window, operand 7, single buffered']
    #allocation12 [shape = 'u8[131072]{0}', space=vmem, size = 0x20000, scoped, tag = 'output window, operand 0, single buffered']
    %20 = vsyncpa [#allocation7], 0
    %21 = vsyncpa [#allocation10], 0
    %22 = vsyncpa [#allocation8], 0
    // Predicated region
    $region2: #{tpu_custom_call.1} parent=1 // pred_check
      _
    $region3: #{tpu_custom_call.1} parent=1 // pred_check_branch
      %24 = sbr.rel (0) target = $region5
    $region4: #{tpu_custom_call.1} parent=1 // pred_region
      _
    $region5: #{tpu_custom_call.1} parent=1 // pred_fallthru
      _
    // Predicated region
    $region6: #{tpu_custom_call.1} parent=1 // pred_check
      _
    $region7: #{tpu_custom_call.1} parent=1 // pred_check_branch
      %26 = sbr.rel (0) target = $region9
    $region8: #{tpu_custom_call.1} parent=1 // pred_region
      %s28 = ssub.s32 8064, 8064
      %29 = vsyncadd [#allocation7], %s28
      %s30 = sshll.u32 [#allocation6], 4
      %s31 = int_to_ptr.vmem [resolvable:$true] %s30
      %36 = dma.hbm_to_vmem [thread:$0]  %s2, 8064, %s31, [#allocation7], 128, 128, 8
    $region9: #{tpu_custom_call.1} parent=1 // pred_fallthru
      _
    // Predicated region
    $region10: #{tpu_custom_call.1} parent=1 // pred_check
      _
    $region11: #{tpu_custom_call.1} parent=1 // pred_check_branch
      %38 = sbr.rel (0) target = $region13
    $region12: #{tpu_custom_call.1} parent=1 // pred_region
      _
    $region13: #{tpu_custom_call.1} parent=1 // pred_fallthru
      _
    // Predicated region
    $region14: #{tpu_custom_call.1} parent=1 // pred_check
      _
    $region15: #{tpu_custom_call.1} parent=1 // pred_check_branch
      %40 = sbr.rel (0) target = $region17
    $region16: #{tpu_custom_call.1} parent=1 // pred_region
      _
    $region17: #{tpu_custom_call.1} parent=1 // pred_fallthru
      _
    // Predicated region
    $region18: #{tpu_custom_call.1} parent=1 // pred_check
      _
    $region19: #{tpu_custom_call.1} parent=1 // pred_check_branch
      %42 = sbr.rel (0) target = $region21
    $region20: #{tpu_custom_call.1} parent=1 // pred_region
      %s44 = ssub.s32 2048, 2048
      %45 = vsyncadd [#allocation10], %s44
      %s46 = sshll.u32 [#allocation9], 4
      %s47 = int_to_ptr.vmem [resolvable:$true] %s46
      %52 = dma.hbm_to_vmem [thread:$0]  %s5, 2048, %s47, [#allocation10], 128, 128, 8
    $region21: #{tpu_custom_call.1} parent=1 // pred_fallthru
      _
    // Predicated region
    $region22: #{tpu_custom_call.1} parent=1 // pred_check
      _
    $region23: #{tpu_custom_call.1} parent=1 // pred_check_branch
      %54 = sbr.rel (0) target = $region25
    $region24: #{tpu_custom_call.1} parent=1 // pred_region
      _
    $region25: #{tpu_custom_call.1} parent=1 // pred_fallthru
      _
    // Predicated region
    $region26: #{tpu_custom_call.1} parent=1 // pred_check
      _
    $region27: #{tpu_custom_call.1} parent=1 // pred_check_branch
      %56 = sbr.rel (0) target = $region29
    $region28: #{tpu_custom_call.1} parent=1 // pred_region
      %s58 = ssub.s32 4096, 4096
      %59 = vsyncadd [#allocation10], %s58
      %s60 = sshll.u32 [#allocation11], 4
      %s61 = int_to_ptr.vmem [resolvable:$true] %s60
      %66 = dma.hbm_to_vmem [thread:$0]  %s7, 4096, %s61, [#allocation10], 128, 128, 8
    $region29: #{tpu_custom_call.1} parent=1 // pred_fallthru
      _
    // Predicated region
    $region30: #{tpu_custom_call.1} parent=1 // pred_check
      _
    $region31: #{tpu_custom_call.1} parent=1 // pred_check_branch
      %68 = sbr.rel (0) target = $region33
    $region32: #{tpu_custom_call.1} parent=1 // pred_region
      _
    $region33: #{tpu_custom_call.1} parent=1 // pred_fallthru
      _
    // Predicated region
    $region34: #{tpu_custom_call.1} parent=1 // pred_check
      _
    $region35: #{tpu_custom_call.1} parent=1 // pred_check_branch
      %70 = sbr.rel (0) target = $region37
    $region36: #{tpu_custom_call.1} parent=1 // pred_region
      %71 = dma.done [#allocation7], 8064
    $region37: #{tpu_custom_call.1} parent=1 // pred_fallthru
      _
    // Predicated region
    $region38: #{tpu_custom_call.1} parent=1 // pred_check
      _
    $region39: #{tpu_custom_call.1} parent=1 // pred_check_branch
      %73 = sbr.rel (0) target = $region41
    $region40: #{tpu_custom_call.1} parent=1 // pred_region
      %74 = dma.done [#allocation10], 2048
    $region41: #{tpu_custom_call.1} parent=1 // pred_fallthru
      _
    // Predicated region
    $region42: #{tpu_custom_call.1} parent=1 // pred_check
      _
    $region43: #{tpu_custom_call.1} parent=1 // pred_check_branch
      %76 = sbr.rel (0) target = $region45
    $region44: #{tpu_custom_call.1} parent=1 // pred_region
      %77 = dma.done [#allocation10], 4096
    $region45: #{tpu_custom_call.1} parent=1 // pred_fallthru
      _
    %s78 = smul.u32 0, 256
    loop: start=0, step=1, limit=32
    $region46: #{tpu_custom_call.1} parent=1 // loop_pre_header
      _
    $region47: #{tpu_custom_call.1} parent=1 // loop_header
      %s80 = sphi 0, %s84
      %p81 = scmp.ge.s32.totalorder %s80, 32
    $region48: #{tpu_custom_call.1} parent=1 // loop_header_branch
      %83 = sbr.rel (%p81) target = $region52
    $region49: #{tpu_custom_call.1} parent=1 // loop_body
      %s85 = smul.u32 %s80, 8
      %s86 = sadd.s32 %s78, %s85
      %s87 = sshra.s32 %s86, 7
      %s88 = sand.u32 %s86, 127
      %s89 = smul.u32 %s87, 256
      %s90 = sshra.s32 %s86, 7
      %s91 = sand.u32 %s86, 127
      %s92 = sadd.s32 %s89, %s91
      %s93 = sld [smem:[#allocation5 + %s92]]
      %s94 = sadd.s32 128, %s91
      %s95 = sadd.s32 %s89, %s94
      %s96 = sld [smem:[#allocation5 + %s95]]
      %s97 = scalar_lea.vmem [#allocation6], %s93
      %v98 = vld [vmem:[%s97] sm:$0x1]
      %s99 = scalar_lea.vmem [#allocation2], %s85
      %100 = vst [vmem:[%s99] sm:$0x1] %v98
      %s101 = scalar_lea.vmem [#allocation6], %s96
      %v102 = vld [vmem:[%s101] sm:$0x1]
      %s103 = scalar_lea.vmem [#allocation3], %s85
      %104 = vst [vmem:[%s103] sm:$0x1] %v102
      %s105 = sadd.s32 %s85, 1
      %s106 = sadd.s32 %s78, %s105
      %s107 = sshra.s32 %s106, 7
      %s108 = sand.u32 %s106, 127
      %s109 = smul.u32 %s107, 256
      %s110 = sshra.s32 %s106, 7
      %s111 = sand.u32 %s106, 127
      %s112 = sadd.s32 %s109, %s111
      %s113 = sld [smem:[#allocation5 + %s112]]
      %s114 = sadd.s32 128, %s111
      %s115 = sadd.s32 %s109, %s114
      %s116 = sld [smem:[#allocation5 + %s115]]
      %s117 = scalar_lea.vmem [#allocation6], %s113
      %v118 = vld [vmem:[%s117] sm:$0x1]
      %s119 = scalar_lea.vmem [#allocation2], %s105
      %120 = vst [vmem:[%s119] sm:$0x1] %v118
      %s121 = scalar_lea.vmem [#allocation6], %s116
      %v122 = vld [vmem:[%s121] sm:$0x1]
      %s123 = scalar_lea.vmem [#allocation3], %s105
      %124 = vst [vmem:[%s123] sm:$0x1] %v122
      %s125 = sadd.s32 %s85, 2
      %s126 = sadd.s32 %s78, %s125
      %s127 = sshra.s32 %s126, 7
      %s128 = sand.u32 %s126, 127
      %s129 = smul.u32 %s127, 256
      %s130 = sshra.s32 %s126, 7
      %s131 = sand.u32 %s126, 127
      %s132 = sadd.s32 %s129, %s131
      %s133 = sld [smem:[#allocation5 + %s132]]
      %s134 = sadd.s32 128, %s131
      %s135 = sadd.s32 %s129, %s134
      %s136 = sld [smem:[#allocation5 + %s135]]
      %s137 = scalar_lea.vmem [#allocation6], %s133
      %v138 = vld [vmem:[%s137] sm:$0x1]
      %s139 = scalar_lea.vmem [#allocation2], %s125
      %140 = vst [vmem:[%s139] sm:$0x1] %v138
      %s141 = scalar_lea.vmem [#allocation6], %s136
      %v142 = vld [vmem:[%s141] sm:$0x1]
      %s143 = scalar_lea.vmem [#allocation3], %s125
      %144 = vst [vmem:[%s143] sm:$0x1] %v142
      %s145 = sadd.s32 %s85, 3
      %s146 = sadd.s32 %s78, %s145
      %s147 = sshra.s32 %s146, 7
      %s148 = sand.u32 %s146, 127
      %s149 = smul.u32 %s147, 256
      %s150 = sshra.s32 %s146, 7
      %s151 = sand.u32 %s146, 127
      %s152 = sadd.s32 %s149, %s151
      %s153 = sld [smem:[#allocation5 + %s152]]
      %s154 = sadd.s32 128, %s151
      %s155 = sadd.s32 %s149, %s154
      %s156 = sld [smem:[#allocation5 + %s155]]
      %s157 = scalar_lea.vmem [#allocation6], %s153
      %v158 = vld [vmem:[%s157] sm:$0x1]
      %s159 = scalar_lea.vmem [#allocation2], %s145
      %160 = vst [vmem:[%s159] sm:$0x1] %v158
      %s161 = scalar_lea.vmem [#allocation6], %s156
      %v162 = vld [vmem:[%s161] sm:$0x1]
      %s163 = scalar_lea.vmem [#allocation3], %s145
      %164 = vst [vmem:[%s163] sm:$0x1] %v162
      %s165 = sadd.s32 %s85, 4
      %s166 = sadd.s32 %s78, %s165
      %s167 = sshra.s32 %s166, 7
      %s168 = sand.u32 %s166, 127
      %s169 = smul.u32 %s167, 256
      %s170 = sshra.s32 %s166, 7
      %s171 = sand.u32 %s166, 127
      %s172 = sadd.s32 %s169, %s171
      %s173 = sld [smem:[#allocation5 + %s172]]
      %s174 = sadd.s32 128, %s171
      %s175 = sadd.s32 %s169, %s174
      %s176 = sld [smem:[#allocation5 + %s175]]
      %s177 = scalar_lea.vmem [#allocation6], %s173
      %v178 = vld [vmem:[%s177] sm:$0x1]
      %s179 = scalar_lea.vmem [#allocation2], %s165
      %180 = vst [vmem:[%s179] sm:$0x1] %v178
      %s181 = scalar_lea.vmem [#allocation6], %s176
      %v182 = vld [vmem:[%s181] sm:$0x1]
      %s183 = scalar_lea.vmem [#allocation3], %s165
      %184 = vst [vmem:[%s183] sm:$0x1] %v182
      %s185 = sadd.s32 %s85, 5
      %s186 = sadd.s32 %s78, %s185
      %s187 = sshra.s32 %s186, 7
      %s188 = sand.u32 %s186, 127
      %s189 = smul.u32 %s187, 256
      %s190 = sshra.s32 %s186, 7
      %s191 = sand.u32 %s186, 127
      %s192 = sadd.s32 %s189, %s191
      %s193 = sld [smem:[#allocation5 + %s192]]
      %s194 = sadd.s32 128, %s191
      %s195 = sadd.s32 %s189, %s194
      %s196 = sld [smem:[#allocation5 + %s195]]
      %s197 = scalar_lea.vmem [#allocation6], %s193
      %v198 = vld [vmem:[%s197] sm:$0x1]
      %s199 = scalar_lea.vmem [#allocation2], %s185
      %200 = vst [vmem:[%s199] sm:$0x1] %v198
      %s201 = scalar_lea.vmem [#allocation6], %s196
      %v202 = vld [vmem:[%s201] sm:$0x1]
      %s203 = scalar_lea.vmem [#allocation3], %s185
      %204 = vst [vmem:[%s203] sm:$0x1] %v202
      %s205 = sadd.s32 %s85, 6
      %s206 = sadd.s32 %s78, %s205
      %s207 = sshra.s32 %s206, 7
      %s208 = sand.u32 %s206, 127
      %s209 = smul.u32 %s207, 256
      %s210 = sshra.s32 %s206, 7
      %s211 = sand.u32 %s206, 127
      %s212 = sadd.s32 %s209, %s211
      %s213 = sld [smem:[#allocation5 + %s212]]
      %s214 = sadd.s32 128, %s211
      %s215 = sadd.s32 %s209, %s214
      %s216 = sld [smem:[#allocation5 + %s215]]
      %s217 = scalar_lea.vmem [#allocation6], %s213
      %v218 = vld [vmem:[%s217] sm:$0x1]
      %s219 = scalar_lea.vmem [#allocation2], %s205
      %220 = vst [vmem:[%s219] sm:$0x1] %v218
      %s221 = scalar_lea.vmem [#allocation6], %s216
      %v222 = vld [vmem:[%s221] sm:$0x1]
      %s223 = scalar_lea.vmem [#allocation3], %s205
      %224 = vst [vmem:[%s223] sm:$0x1] %v222
      %s225 = sadd.s32 %s85, 7
      %s226 = sadd.s32 %s78, %s225
      %s227 = sshra.s32 %s226, 7
      %s228 = sand.u32 %s226, 127
      %s229 = smul.u32 %s227, 256
      %s230 = sshra.s32 %s226, 7
      %s231 = sand.u32 %s226, 127
      %s232 = sadd.s32 %s229, %s231
      %s233 = sld [smem:[#allocation5 + %s232]]
      %s234 = sadd.s32 128, %s231
      %s235 = sadd.s32 %s229, %s234
      %s236 = sld [smem:[#allocation5 + %s235]]
      %s237 = scalar_lea.vmem [#allocation6], %s233
      %v238 = vld [vmem:[%s237] sm:$0x1]
      %s239 = scalar_lea.vmem [#allocation2], %s225
      %240 = vst [vmem:[%s239] sm:$0x1] %v238
      %s241 = scalar_lea.vmem [#allocation6], %s236
      %v242 = vld [vmem:[%s241] sm:$0x1]
      %s243 = scalar_lea.vmem [#allocation3], %s225
      %244 = vst [vmem:[%s243] sm:$0x1] %v242
    $region50: #{tpu_custom_call.1} parent=1 // loop_footer
      %s84 = sadd.s32 1, %s80
    $region51: #{tpu_custom_call.1} parent=1 // loop_footer_branch
      %79 = sbr.rel target = $region47
    $region52: #{tpu_custom_call.1} parent=1 // loop_exit
      _
    %v245 = vld [vmem:[%s1] sm:$0xff]
    %v246 = vld [vmem:[%s1 + $0x8] sm:$0xff]
    %v247 = vld [vmem:[%s1 + $0x10] sm:$0xff]
    %v248 = vld [vmem:[%s1 + $0x18] sm:$0xff]
    %v249 = vld [vmem:[%s1 + $0x20] sm:$0xff]
    %v250 = vld [vmem:[%s1 + $0x28] sm:$0xff]
    %v251 = vld [vmem:[%s1 + $0x30] sm:$0xff]
    %v252 = vld [vmem:[%s1 + $0x38] sm:$0xff]
    %v253 = vld [vmem:[%s1 + $0x40] sm:$0xff]
    %v254 = vld [vmem:[%s1 + $0x48] sm:$0xff]
    %v255 = vld [vmem:[%s1 + $0x50] sm:$0xff]
    %v256 = vld [vmem:[%s1 + $0x58] sm:$0xff]
    %v257 = vld [vmem:[%s1 + $0x60] sm:$0xff]
    %v258 = vld [vmem:[%s1 + $0x68] sm:$0xff]
    %v259 = vld [vmem:[%s1 + $0x70] sm:$0xff]
    %v260 = vld [vmem:[%s1 + $0x78] sm:$0xff]
    %v261 = vld [vmem:[%s1 + $0x80] sm:$0xff]
    %v262 = vld [vmem:[%s1 + $0x88] sm:$0xff]
    %v263 = vld [vmem:[%s1 + $0x90] sm:$0xff]
    %v264 = vld [vmem:[%s1 + $0x98] sm:$0xff]
    %v265 = vld [vmem:[%s1 + $0xa0] sm:$0xff]
    %v266 = vld [vmem:[%s1 + $0xa8] sm:$0xff]
    %v267 = vld [vmem:[%s1 + $0xb0] sm:$0xff]
    %v268 = vld [vmem:[%s1 + $0xb8] sm:$0xff]
    %v269 = vld [vmem:[%s1 + $0xc0] sm:$0xff]
    %v270 = vld [vmem:[%s1 + $0xc8] sm:$0xff]
    %v271 = vld [vmem:[%s1 + $0xd0] sm:$0xff]
    %v272 = vld [vmem:[%s1 + $0xd8] sm:$0xff]
    %v273 = vld [vmem:[%s1 + $0xe0] sm:$0xff]
    %v274 = vld [vmem:[%s1 + $0xe8] sm:$0xff]
    %v275 = vld [vmem:[%s1 + $0xf0] sm:$0xff]
    %v276 = vld [vmem:[%s1 + $0xf8] sm:$0xff]
    %v277 = vld [vmem:[#allocation2] sm:$0xff]
    %v278 = vld [vmem:[#allocation2 + $0x8] sm:$0xff]
    %v279 = vld [vmem:[#allocation2 + $0x10] sm:$0xff]
    %v280 = vld [vmem:[#allocation2 + $0x18] sm:$0xff]
    %v281 = vld [vmem:[#allocation2 + $0x20] sm:$0xff]
    %v282 = vld [vmem:[#allocation2 + $0x28] sm:$0xff]
    %v283 = vld [vmem:[#allocation2 + $0x30] sm:$0xff]
    %v284 = vld [vmem:[#allocation2 + $0x38] sm:$0xff]
    %v285 = vld [vmem:[#allocation2 + $0x40] sm:$0xff]
    %v286 = vld [vmem:[#allocation2 + $0x48] sm:$0xff]
    %v287 = vld [vmem:[#allocation2 + $0x50] sm:$0xff]
    %v288 = vld [vmem:[#allocation2 + $0x58] sm:$0xff]
    %v289 = vld [vmem:[#allocation2 + $0x60] sm:$0xff]
    %v290 = vld [vmem:[#allocation2 + $0x68] sm:$0xff]
    %v291 = vld [vmem:[#allocation2 + $0x70] sm:$0xff]
    %v292 = vld [vmem:[#allocation2 + $0x78] sm:$0xff]
    %v293 = vld [vmem:[#allocation2 + $0x80] sm:$0xff]
    %v294 = vld [vmem:[#allocation2 + $0x88] sm:$0xff]
    %v295 = vld [vmem:[#allocation2 + $0x90] sm:$0xff]
    %v296 = vld [vmem:[#allocation2 + $0x98] sm:$0xff]
    %v297 = vld [vmem:[#allocation2 + $0xa0] sm:$0xff]
    %v298 = vld [vmem:[#allocation2 + $0xa8] sm:$0xff]
    %v299 = vld [vmem:[#allocation2 + $0xb0] sm:$0xff]
    %v300 = vld [vmem:[#allocation2 + $0xb8] sm:$0xff]
    %v301 = vld [vmem:[#allocation2 + $0xc0] sm:$0xff]
    %v302 = vld [vmem:[#allocation2 + $0xc8] sm:$0xff]
    %v303 = vld [vmem:[#allocation2 + $0xd0] sm:$0xff]
    %v304 = vld [vmem:[#allocation2 + $0xd8] sm:$0xff]
    %v305 = vld [vmem:[#allocation2 + $0xe0] sm:$0xff]
    %v306 = vld [vmem:[#allocation2 + $0xe8] sm:$0xff]
    %v307 = vld [vmem:[#allocation2 + $0xf0] sm:$0xff]
    %v308 = vld [vmem:[#allocation2 + $0xf8] sm:$0xff]
    %310 = vset.pattern.permute.xlu0 0
    %311 = vperm.xlu0 %310, %v245
    %v312 = vpop.permute.xlu0 %311
    %315 = vset.pattern.permute.xlu0 0
    %316 = vperm.xlu0 %315, %v246
    %v317 = vpop.permute.xlu0 %316
    %320 = vset.pattern.permute.xlu0 0
    %321 = vperm.xlu0 %320, %v247
    %v322 = vpop.permute.xlu0 %321
    %325 = vset.pattern.permute.xlu0 0
    %326 = vperm.xlu0 %325, %v248
    %v327 = vpop.permute.xlu0 %326
    %330 = vset.pattern.permute.xlu0 0
    %331 = vperm.xlu0 %330, %v249
    %v332 = vpop.permute.xlu0 %331
    %335 = vset.pattern.permute.xlu0 0
    %336 = vperm.xlu0 %335, %v250
    %v337 = vpop.permute.xlu0 %336
    %340 = vset.pattern.permute.xlu0 0
    %341 = vperm.xlu0 %340, %v251
    %v342 = vpop.permute.xlu0 %341
    %345 = vset.pattern.permute.xlu0 0
    %346 = vperm.xlu0 %345, %v252
    %v347 = vpop.permute.xlu0 %346
    %350 = vset.pattern.permute.xlu0 0
    %351 = vperm.xlu0 %350, %v253
    %v352 = vpop.permute.xlu0 %351
    %355 = vset.pattern.permute.xlu0 0
    %356 = vperm.xlu0 %355, %v254
    %v357 = vpop.permute.xlu0 %356
    %360 = vset.pattern.permute.xlu0 0
    %361 = vperm.xlu0 %360, %v255
    %v362 = vpop.permute.xlu0 %361
    %365 = vset.pattern.permute.xlu0 0
    %366 = vperm.xlu0 %365, %v256
    %v367 = vpop.permute.xlu0 %366
    %370 = vset.pattern.permute.xlu0 0
    %371 = vperm.xlu0 %370, %v257
    %v372 = vpop.permute.xlu0 %371
    %375 = vset.pattern.permute.xlu0 0
    %376 = vperm.xlu0 %375, %v258
    %v377 = vpop.permute.xlu0 %376
    %380 = vset.pattern.permute.xlu0 0
    %381 = vperm.xlu0 %380, %v259
    %v382 = vpop.permute.xlu0 %381
    %385 = vset.pattern.permute.xlu0 0
    %386 = vperm.xlu0 %385, %v260
    %v387 = vpop.permute.xlu0 %386
    %390 = vset.pattern.permute.xlu0 0
    %391 = vperm.xlu0 %390, %v261
    %v392 = vpop.permute.xlu0 %391
    %395 = vset.pattern.permute.xlu0 0
    %396 = vperm.xlu0 %395, %v262
    %v397 = vpop.permute.xlu0 %396
    %400 = vset.pattern.permute.xlu0 0
    %401 = vperm.xlu0 %400, %v263
    %v402 = vpop.permute.xlu0 %401
    %405 = vset.pattern.permute.xlu0 0
    %406 = vperm.xlu0 %405, %v264
    %v407 = vpop.permute.xlu0 %406
    %410 = vset.pattern.permute.xlu0 0
    %411 = vperm.xlu0 %410, %v265
    %v412 = vpop.permute.xlu0 %411
    %415 = vset.pattern.permute.xlu0 0
    %416 = vperm.xlu0 %415, %v266
    %v417 = vpop.permute.xlu0 %416
    %420 = vset.pattern.permute.xlu0 0
    %421 = vperm.xlu0 %420, %v267
    %v422 = vpop.permute.xlu0 %421
    %425 = vset.pattern.permute.xlu0 0
    %426 = vperm.xlu0 %425, %v268
    %v427 = vpop.permute.xlu0 %426
    %430 = vset.pattern.permute.xlu0 0
    %431 = vperm.xlu0 %430, %v269
    %v432 = vpop.permute.xlu0 %431
    %435 = vset.pattern.permute.xlu0 0
    %436 = vperm.xlu0 %435, %v270
    %v437 = vpop.permute.xlu0 %436
    %440 = vset.pattern.permute.xlu0 0
    %441 = vperm.xlu0 %440, %v271
    %v442 = vpop.permute.xlu0 %441
    %445 = vset.pattern.permute.xlu0 0
    %446 = vperm.xlu0 %445, %v272
    %v447 = vpop.permute.xlu0 %446
    %450 = vset.pattern.permute.xlu0 0
    %451 = vperm.xlu0 %450, %v273
    %v452 = vpop.permute.xlu0 %451
    %455 = vset.pattern.permute.xlu0 0
    %456 = vperm.xlu0 %455, %v274
    %v457 = vpop.permute.xlu0 %456
    %460 = vset.pattern.permute.xlu0 0
    %461 = vperm.xlu0 %460, %v275
    %v462 = vpop.permute.xlu0 %461
    %465 = vset.pattern.permute.xlu0 0
    %466 = vperm.xlu0 %465, %v276
    %v467 = vpop.permute.xlu0 %466
    %v469 = vmul.f32 %v277, %v312
    %v470 = vmul.f32 %v278, %v317
    %v471 = vmul.f32 %v279, %v322
    %v472 = vmul.f32 %v280, %v327
    %v473 = vmul.f32 %v281, %v332
    %v474 = vmul.f32 %v282, %v337
    %v475 = vmul.f32 %v283, %v342
    %v476 = vmul.f32 %v284, %v347
    %v477 = vmul.f32 %v285, %v352
    %v478 = vmul.f32 %v286, %v357
    %v479 = vmul.f32 %v287, %v362
    %v480 = vmul.f32 %v288, %v367
    %v481 = vmul.f32 %v289, %v372
    %v482 = vmul.f32 %v290, %v377
    %v483 = vmul.f32 %v291, %v382
    %v484 = vmul.f32 %v292, %v387
    %v485 = vmul.f32 %v293, %v392
    %v486 = vmul.f32 %v294, %v397
    %v487 = vmul.f32 %v295, %v402
    %v488 = vmul.f32 %v296, %v407
    %v489 = vmul.f32 %v297, %v412
    %v490 = vmul.f32 %v298, %v417
    %v491 = vmul.f32 %v299, %v422
    %v492 = vmul.f32 %v300, %v427
    %v493 = vmul.f32 %v301, %v432
    %v494 = vmul.f32 %v302, %v437
    %v495 = vmul.f32 %v303, %v442
    %v496 = vmul.f32 %v304, %v447
    %v497 = vmul.f32 %v305, %v452
    %v498 = vmul.f32 %v306, %v457
    %v499 = vmul.f32 %v307, %v462
    %v500 = vmul.f32 %v308, %v467
    %v501 = vld [vmem:[#allocation3] sm:$0xff]
    %v502 = vld [vmem:[#allocation3 + $0x8] sm:$0xff]
    %v503 = vld [vmem:[#allocation3 + $0x10] sm:$0xff]
    %v504 = vld [vmem:[#allocation3 + $0x18] sm:$0xff]
    %v505 = vld [vmem:[#allocation3 + $0x20] sm:$0xff]
    %v506 = vld [vmem:[#allocation3 + $0x28] sm:$0xff]
    %v507 = vld [vmem:[#allocation3 + $0x30] sm:$0xff]
    %v508 = vld [vmem:[#allocation3 + $0x38] sm:$0xff]
    %v509 = vld [vmem:[#allocation3 + $0x40] sm:$0xff]
    %v510 = vld [vmem:[#allocation3 + $0x48] sm:$0xff]
    %v511 = vld [vmem:[#allocation3 + $0x50] sm:$0xff]
    %v512 = vld [vmem:[#allocation3 + $0x58] sm:$0xff]
    %v513 = vld [vmem:[#allocation3 + $0x60] sm:$0xff]
    %v514 = vld [vmem:[#allocation3 + $0x68] sm:$0xff]
    %v515 = vld [vmem:[#allocation3 + $0x70] sm:$0xff]
    %v516 = vld [vmem:[#allocation3 + $0x78] sm:$0xff]
    %v517 = vld [vmem:[#allocation3 + $0x80] sm:$0xff]
    %v518 = vld [vmem:[#allocation3 + $0x88] sm:$0xff]
    %v519 = vld [vmem:[#allocation3 + $0x90] sm:$0xff]
    %v520 = vld [vmem:[#allocation3 + $0x98] sm:$0xff]
    %v521 = vld [vmem:[#allocation3 + $0xa0] sm:$0xff]
    %v522 = vld [vmem:[#allocation3 + $0xa8] sm:$0xff]
    %v523 = vld [vmem:[#allocation3 + $0xb0] sm:$0xff]
    %v524 = vld [vmem:[#allocation3 + $0xb8] sm:$0xff]
    %v525 = vld [vmem:[#allocation3 + $0xc0] sm:$0xff]
    %v526 = vld [vmem:[#allocation3 + $0xc8] sm:$0xff]
    %v527 = vld [vmem:[#allocation3 + $0xd0] sm:$0xff]
    %v528 = vld [vmem:[#allocation3 + $0xd8] sm:$0xff]
    %v529 = vld [vmem:[#allocation3 + $0xe0] sm:$0xff]
    %v530 = vld [vmem:[#allocation3 + $0xe8] sm:$0xff]
    %v531 = vld [vmem:[#allocation3 + $0xf0] sm:$0xff]
    %v532 = vld [vmem:[#allocation3 + $0xf8] sm:$0xff]
    %533 = vset.pattern.permute.xlu0 1
    %534 = vperm.xlu0 %533, %v245
    %v535 = vpop.permute.xlu0 %534
    %537 = vset.pattern.permute.xlu0 1
    %538 = vperm.xlu0 %537, %v246
    %v539 = vpop.permute.xlu0 %538
    %541 = vset.pattern.permute.xlu0 1
    %542 = vperm.xlu0 %541, %v247
    %v543 = vpop.permute.xlu0 %542
    %545 = vset.pattern.permute.xlu0 1
    %546 = vperm.xlu0 %545, %v248
    %v547 = vpop.permute.xlu0 %546
    %549 = vset.pattern.permute.xlu0 1
    %550 = vperm.xlu0 %549, %v249
    %v551 = vpop.permute.xlu0 %550
    %553 = vset.pattern.permute.xlu0 1
    %554 = vperm.xlu0 %553, %v250
    %v555 = vpop.permute.xlu0 %554
    %557 = vset.pattern.permute.xlu0 1
    %558 = vperm.xlu0 %557, %v251
    %v559 = vpop.permute.xlu0 %558
    %561 = vset.pattern.permute.xlu0 1
    %562 = vperm.xlu0 %561, %v252
    %v563 = vpop.permute.xlu0 %562
    %565 = vset.pattern.permute.xlu0 1
    %566 = vperm.xlu0 %565, %v253
    %v567 = vpop.permute.xlu0 %566
    %569 = vset.pattern.permute.xlu0 1
    %570 = vperm.xlu0 %569, %v254
    %v571 = vpop.permute.xlu0 %570
    %573 = vset.pattern.permute.xlu0 1
    %574 = vperm.xlu0 %573, %v255
    %v575 = vpop.permute.xlu0 %574
    %577 = vset.pattern.permute.xlu0 1
    %578 = vperm.xlu0 %577, %v256
    %v579 = vpop.permute.xlu0 %578
    %581 = vset.pattern.permute.xlu0 1
    %582 = vperm.xlu0 %581, %v257
    %v583 = vpop.permute.xlu0 %582
    %585 = vset.pattern.permute.xlu0 1
    %586 = vperm.xlu0 %585, %v258
    %v587 = vpop.permute.xlu0 %586
    %589 = vset.pattern.permute.xlu0 1
    %590 = vperm.xlu0 %589, %v259
    %v591 = vpop.permute.xlu0 %590
    %593 = vset.pattern.permute.xlu0 1
    %594 = vperm.xlu0 %593, %v260
    %v595 = vpop.permute.xlu0 %594
    %597 = vset.pattern.permute.xlu0 1
    %598 = vperm.xlu0 %597, %v261
    %v599 = vpop.permute.xlu0 %598
    %601 = vset.pattern.permute.xlu0 1
    %602 = vperm.xlu0 %601, %v262
    %v603 = vpop.permute.xlu0 %602
    %605 = vset.pattern.permute.xlu0 1
    %606 = vperm.xlu0 %605, %v263
    %v607 = vpop.permute.xlu0 %606
    %609 = vset.pattern.permute.xlu0 1
    %610 = vperm.xlu0 %609, %v264
    %v611 = vpop.permute.xlu0 %610
    %613 = vset.pattern.permute.xlu0 1
    %614 = vperm.xlu0 %613, %v265
    %v615 = vpop.permute.xlu0 %614
    %617 = vset.pattern.permute.xlu0 1
    %618 = vperm.xlu0 %617, %v266
    %v619 = vpop.permute.xlu0 %618
    %621 = vset.pattern.permute.xlu0 1
    %622 = vperm.xlu0 %621, %v267
    %v623 = vpop.permute.xlu0 %622
    %625 = vset.pattern.permute.xlu0 1
    %626 = vperm.xlu0 %625, %v268
    %v627 = vpop.permute.xlu0 %626
    %629 = vset.pattern.permute.xlu0 1
    %630 = vperm.xlu0 %629, %v269
    %v631 = vpop.permute.xlu0 %630
    %633 = vset.pattern.permute.xlu0 1
    %634 = vperm.xlu0 %633, %v270
    %v635 = vpop.permute.xlu0 %634
    %637 = vset.pattern.permute.xlu0 1
    %638 = vperm.xlu0 %637, %v271
    %v639 = vpop.permute.xlu0 %638
    %641 = vset.pattern.permute.xlu0 1
    %642 = vperm.xlu0 %641, %v272
    %v643 = vpop.permute.xlu0 %642
    %645 = vset.pattern.permute.xlu0 1
    %646 = vperm.xlu0 %645, %v273
    %v647 = vpop.permute.xlu0 %646
    %649 = vset.pattern.permute.xlu0 1
    %650 = vperm.xlu0 %649, %v274
    %v651 = vpop.permute.xlu0 %650
    %653 = vset.pattern.permute.xlu0 1
    %654 = vperm.xlu0 %653, %v275
    %v655 = vpop.permute.xlu0 %654
    %657 = vset.pattern.permute.xlu0 1
    %658 = vperm.xlu0 %657, %v276
    %v659 = vpop.permute.xlu0 %658
    %v661 = vmul.f32 %v501, %v535
    %v662 = vmul.f32 %v502, %v539
    %v663 = vmul.f32 %v503, %v543
    %v664 = vmul.f32 %v504, %v547
    %v665 = vmul.f32 %v505, %v551
    %v666 = vmul.f32 %v506, %v555
    %v667 = vmul.f32 %v507, %v559
    %v668 = vmul.f32 %v508, %v563
    %v669 = vmul.f32 %v509, %v567
    %v670 = vmul.f32 %v510, %v571
    %v671 = vmul.f32 %v511, %v575
    %v672 = vmul.f32 %v512, %v579
    %v673 = vmul.f32 %v513, %v583
    %v674 = vmul.f32 %v514, %v587
    %v675 = vmul.f32 %v515, %v591
    %v676 = vmul.f32 %v516, %v595
    %v677 = vmul.f32 %v517, %v599
    %v678 = vmul.f32 %v518, %v603
    %v679 = vmul.f32 %v519, %v607
    %v680 = vmul.f32 %v520, %v611
    %v681 = vmul.f32 %v521, %v615
    %v682 = vmul.f32 %v522, %v619
    %v683 = vmul.f32 %v523, %v623
    %v684 = vmul.f32 %v524, %v627
    %v685 = vmul.f32 %v525, %v631
    %v686 = vmul.f32 %v526, %v635
    %v687 = vmul.f32 %v527, %v639
    %v688 = vmul.f32 %v528, %v643
    %v689 = vmul.f32 %v529, %v647
    %v690 = vmul.f32 %v530, %v651
    %v691 = vmul.f32 %v531, %v655
    %v692 = vmul.f32 %v532, %v659
    %v693 = vmul.f32 %v469, %v661
    %v694 = vmul.f32 %v470, %v662
    %v695 = vmul.f32 %v471, %v663
    %v696 = vmul.f32 %v472, %v664
    %v697 = vmul.f32 %v473, %v665
    %v698 = vmul.f32 %v474, %v666
    %v699 = vmul.f32 %v475, %v667
    %v700 = vmul.f32 %v476, %v668
    %v701 = vmul.f32 %v477, %v669
    %v702 = vmul.f32 %v478, %v670
    %v703 = vmul.f32 %v479, %v671
    %v704 = vmul.f32 %v480, %v672
    %v705 = vmul.f32 %v481, %v673
    %v706 = vmul.f32 %v482, %v674
    %v707 = vmul.f32 %v483, %v675
    %v708 = vmul.f32 %v484, %v676
    %v709 = vmul.f32 %v485, %v677
    %v710 = vmul.f32 %v486, %v678
    %v711 = vmul.f32 %v487, %v679
    %v712 = vmul.f32 %v488, %v680
    %v713 = vmul.f32 %v489, %v681
    %v714 = vmul.f32 %v490, %v682
    %v715 = vmul.f32 %v491, %v683
    %v716 = vmul.f32 %v492, %v684
    %v717 = vmul.f32 %v493, %v685
    %v718 = vmul.f32 %v494, %v686
    %v719 = vmul.f32 %v495, %v687
    %v720 = vmul.f32 %v496, %v688
    %v721 = vmul.f32 %v497, %v689
    %v722 = vmul.f32 %v498, %v690
    %v723 = vmul.f32 %v499, %v691
    %v724 = vmul.f32 %v500, %v692
    %v725 = vld [vmem:[%s3] sm:$0xff]
    %v726 = vld [vmem:[%s3 + $0x8] sm:$0xff]
    %v727 = vld [vmem:[%s3 + $0x10] sm:$0xff]
    %v728 = vld [vmem:[%s3 + $0x18] sm:$0xff]
    %v729 = vld [vmem:[%s3 + $0x20] sm:$0xff]
    %v730 = vld [vmem:[%s3 + $0x28] sm:$0xff]
    %v731 = vld [vmem:[%s3 + $0x30] sm:$0xff]
    %v732 = vld [vmem:[%s3 + $0x38] sm:$0xff]
    %v733 = vld [vmem:[%s3 + $0x40] sm:$0xff]
    %v734 = vld [vmem:[%s3 + $0x48] sm:$0xff]
    %v735 = vld [vmem:[%s3 + $0x50] sm:$0xff]
    %v736 = vld [vmem:[%s3 + $0x58] sm:$0xff]
    %v737 = vld [vmem:[%s3 + $0x60] sm:$0xff]
    %v738 = vld [vmem:[%s3 + $0x68] sm:$0xff]
    %v739 = vld [vmem:[%s3 + $0x70] sm:$0xff]
    %v740 = vld [vmem:[%s3 + $0x78] sm:$0xff]
    %v741 = vld [vmem:[%s3 + $0x80] sm:$0xff]
    %v742 = vld [vmem:[%s3 + $0x88] sm:$0xff]
    %v743 = vld [vmem:[%s3 + $0x90] sm:$0xff]
    %v744 = vld [vmem:[%s3 + $0x98] sm:$0xff]
    %v745 = vld [vmem:[%s3 + $0xa0] sm:$0xff]
    %v746 = vld [vmem:[%s3 + $0xa8] sm:$0xff]
    %v747 = vld [vmem:[%s3 + $0xb0] sm:$0xff]
    %v748 = vld [vmem:[%s3 + $0xb8] sm:$0xff]
    %v749 = vld [vmem:[%s3 + $0xc0] sm:$0xff]
    %v750 = vld [vmem:[%s3 + $0xc8] sm:$0xff]
    %v751 = vld [vmem:[%s3 + $0xd0] sm:$0xff]
    %v752 = vld [vmem:[%s3 + $0xd8] sm:$0xff]
    %v753 = vld [vmem:[%s3 + $0xe0] sm:$0xff]
    %v754 = vld [vmem:[%s3 + $0xe8] sm:$0xff]
    %v755 = vld [vmem:[%s3 + $0xf0] sm:$0xff]
    %v756 = vld [vmem:[%s3 + $0xf8] sm:$0xff]
    %v757 = vld [vmem:[%s4] sm:$0x1]
    %v759 = vlaneseq
    %v760 = vshrl.u32 %v759, 7
    %v761 = vsub.s32 0, %v760
    %v762 = vrot.slane %v757, %v761
    %764 = vmatprep.subr.mxu0 0.0
    %765 = vmatpush1.msra.mxu0 %v725
    %766 = vmatprep.subr.mxu0 0.0
    %767 = vmatpush1.msra.mxu0 %v726
    %768 = vmatprep.subr.mxu0 0.0
    %769 = vmatpush1.msra.mxu0 %v727
    %770 = vmatprep.subr.mxu0 0.0
    %771 = vmatpush1.msra.mxu0 %v728
    %772 = vmatprep.subr.mxu0 0.0
    %773 = vmatpush1.msra.mxu0 %v729
    %774 = vmatprep.subr.mxu0 0.0
    %775 = vmatpush1.msra.mxu0 %v730
    %776 = vmatprep.subr.mxu0 0.0
    %777 = vmatpush1.msra.mxu0 %v731
    %778 = vmatprep.subr.mxu0 0.0
    %779 = vmatpush1.msra.mxu0 %v732
    %780 = vmatprep.subr.mxu0 0.0
    %781 = vmatpush1.msra.mxu0 %v733
    %782 = vmatprep.subr.mxu0 0.0
    %783 = vmatpush1.msra.mxu0 %v734
    %784 = vmatprep.subr.mxu0 0.0
    %785 = vmatpush1.msra.mxu0 %v735
    %786 = vmatprep.subr.mxu0 0.0
    %787 = vmatpush1.msra.mxu0 %v736
    %788 = vmatprep.subr.mxu0 0.0
    %789 = vmatpush1.msra.mxu0 %v737
    %790 = vmatprep.subr.mxu0 0.0
    %791 = vmatpush1.msra.mxu0 %v738
    %792 = vmatprep.subr.mxu0 0.0
    %793 = vmatpush1.msra.mxu0 %v739
    %794 = vmatprep.subr.mxu0 0.0
    %795 = vmatpush1.msra.mxu0 %v740
    %796 = vmatprep.subr.mxu0 0.0
    %797 = vmatpush1.msra.mxu0 %v741
    %798 = vmatprep.subr.mxu0 0.0
    %799 = vmatpush1.msra.mxu0 %v742
    %800 = vmatprep.subr.mxu0 0.0
    %801 = vmatpush1.msra.mxu0 %v743
    %802 = vmatprep.subr.mxu0 0.0
    %803 = vmatpush1.msra.mxu0 %v744
    %804 = vmatprep.subr.mxu0 0.0
    %805 = vmatpush1.msra.mxu0 %v745
    %806 = vmatprep.subr.mxu0 0.0
    %807 = vmatpush1.msra.mxu0 %v746
    %808 = vmatprep.subr.mxu0 0.0
    %809 = vmatpush1.msra.mxu0 %v747
    %810 = vmatprep.subr.mxu0 0.0
    %811 = vmatpush1.msra.mxu0 %v748
    %812 = vmatprep.subr.mxu0 0.0
    %813 = vmatpush1.msra.mxu0 %v749
    %814 = vmatprep.subr.mxu0 0.0
    %815 = vmatpush1.msra.mxu0 %v750
    %816 = vmatprep.subr.mxu0 0.0
    %817 = vmatpush1.msra.mxu0 %v751
    %818 = vmatprep.subr.mxu0 0.0
    %819 = vmatpush1.msra.mxu0 %v752
    %820 = vmatprep.subr.mxu0 0.0
    %821 = vmatpush1.msra.mxu0 %v753
    %822 = vmatprep.subr.mxu0 0.0
    %823 = vmatpush1.msra.mxu0 %v754
    %824 = vmatprep.subr.mxu0 0.0
    %825 = vmatpush1.msra.mxu0 %v755
    %826 = vmatprep.subr.mxu0 0.0
    %827 = vmatpush1.msra.mxu0 %v756
    %828 = vmatprep.mubr.f32.mxu0 %v661
    %829 = vmatmul.mubr.f32.gmra.mrb[0].mxu0 %v469
    %v830 = vpop.f32.mrb[0].mxu0
    %v831 = vadd.f32 %v762, %v830
    %v832 = vpop.f32.mrb[0].mxu0
    %833 = vmatprep.mubr.f32.mxu0 %v662
    %834 = vmatmul.mubr.f32.gmra.mrb[0].mxu0 %v470
    %v835 = vpop.f32.mrb[0].mxu0
    %v836 = vadd.f32 %v762, %v835
    %v837 = vpop.f32.mrb[0].mxu0
    %838 = vmatprep.mubr.f32.mxu0 %v663
    %839 = vmatmul.mubr.f32.gmra.mrb[0].mxu0 %v471
    %v840 = vpop.f32.mrb[0].mxu0
    %v841 = vadd.f32 %v762, %v840
    %v842 = vpop.f32.mrb[0].mxu0
    %843 = vmatprep.mubr.f32.mxu0 %v664
    %844 = vmatmul.mubr.f32.gmra.mrb[0].mxu0 %v472
    %v845 = vpop.f32.mrb[0].mxu0
    %v846 = vadd.f32 %v762, %v845
    %v847 = vpop.f32.mrb[0].mxu0
    %848 = vmatprep.mubr.f32.mxu0 %v665
    %849 = vmatmul.mubr.f32.gmra.mrb[0].mxu0 %v473
    %v850 = vpop.f32.mrb[0].mxu0
    %v851 = vadd.f32 %v762, %v850
    %v852 = vpop.f32.mrb[0].mxu0
    %853 = vmatprep.mubr.f32.mxu0 %v666
    %854 = vmatmul.mubr.f32.gmra.mrb[0].mxu0 %v474
    %v855 = vpop.f32.mrb[0].mxu0
    %v856 = vadd.f32 %v762, %v855
    %v857 = vpop.f32.mrb[0].mxu0
    %858 = vmatprep.mubr.f32.mxu0 %v667
    %859 = vmatmul.mubr.f32.gmra.mrb[0].mxu0 %v475
    %v860 = vpop.f32.mrb[0].mxu0
    %v861 = vadd.f32 %v762, %v860
    %v862 = vpop.f32.mrb[0].mxu0
    %863 = vmatprep.mubr.f32.mxu0 %v668
    %864 = vmatmul.mubr.f32.gmra.mrb[0].mxu0 %v476
    %v865 = vpop.f32.mrb[0].mxu0
    %v866 = vadd.f32 %v762, %v865
    %v867 = vpop.f32.mrb[0].mxu0
    %868 = vmatprep.mubr.f32.mxu0 %v669
    %869 = vmatmul.mubr.f32.gmra.mrb[0].mxu0 %v477
    %v870 = vpop.f32.mrb[0].mxu0
    %v871 = vadd.f32 %v762, %v870
    %v872 = vpop.f32.mrb[0].mxu0
    %873 = vmatprep.mubr.f32.mxu0 %v670
    %874 = vmatmul.mubr.f32.gmra.mrb[0].mxu0 %v478
    %v875 = vpop.f32.mrb[0].mxu0
    %v876 = vadd.f32 %v762, %v875
    %v877 = vpop.f32.mrb[0].mxu0
    %878 = vmatprep.mubr.f32.mxu0 %v671
    %879 = vmatmul.mubr.f32.gmra.mrb[0].mxu0 %v479
    %v880 = vpop.f32.mrb[0].mxu0
    %v881 = vadd.f32 %v762, %v880
    %v882 = vpop.f32.mrb[0].mxu0
    %883 = vmatprep.mubr.f32.mxu0 %v672
    %884 = vmatmul.mubr.f32.gmra.mrb[0].mxu0 %v480
    %v885 = vpop.f32.mrb[0].mxu0
    %v886 = vadd.f32 %v762, %v885
    %v887 = vpop.f32.mrb[0].mxu0
    %888 = vmatprep.mubr.f32.mxu0 %v673
    %889 = vmatmul.mubr.f32.gmra.mrb[0].mxu0 %v481
    %v890 = vpop.f32.mrb[0].mxu0
    %v891 = vadd.f32 %v762, %v890
    %v892 = vpop.f32.mrb[0].mxu0
    %893 = vmatprep.mubr.f32.mxu0 %v674
    %894 = vmatmul.mubr.f32.gmra.mrb[0].mxu0 %v482
    %v895 = vpop.f32.mrb[0].mxu0
    %v896 = vadd.f32 %v762, %v895
    %v897 = vpop.f32.mrb[0].mxu0
    %898 = vmatprep.mubr.f32.mxu0 %v675
    %899 = vmatmul.mubr.f32.gmra.mrb[0].mxu0 %v483
    %v900 = vpop.f32.mrb[0].mxu0
    %v901 = vadd.f32 %v762, %v900
    %v902 = vpop.f32.mrb[0].mxu0
    %903 = vmatprep.mubr.f32.mxu0 %v676
    %904 = vmatmul.mubr.f32.gmra.mrb[0].mxu0 %v484
    %v905 = vpop.f32.mrb[0].mxu0
    %v906 = vadd.f32 %v762, %v905
    %v907 = vpop.f32.mrb[0].mxu0
    %908 = vmatprep.mubr.f32.mxu0 %v677
    %909 = vmatmul.mubr.f32.gmra.mrb[0].mxu0 %v485
    %v910 = vpop.f32.mrb[0].mxu0
    %v911 = vadd.f32 %v762, %v910
    %v912 = vpop.f32.mrb[0].mxu0
    %913 = vmatprep.mubr.f32.mxu0 %v678
    %914 = vmatmul.mubr.f32.gmra.mrb[0].mxu0 %v486
    %v915 = vpop.f32.mrb[0].mxu0
    %v916 = vadd.f32 %v762, %v915
    %v917 = vpop.f32.mrb[0].mxu0
    %918 = vmatprep.mubr.f32.mxu0 %v679
    %919 = vmatmul.mubr.f32.gmra.mrb[0].mxu0 %v487
    %v920 = vpop.f32.mrb[0].mxu0
    %v921 = vadd.f32 %v762, %v920
    %v922 = vpop.f32.mrb[0].mxu0
    %923 = vmatprep.mubr.f32.mxu0 %v680
    %924 = vmatmul.mubr.f32.gmra.mrb[0].mxu0 %v488
    %v925 = vpop.f32.mrb[0].mxu0
    %v926 = vadd.f32 %v762, %v925
    %v927 = vpop.f32.mrb[0].mxu0
    %928 = vmatprep.mubr.f32.mxu0 %v681
    %929 = vmatmul.mubr.f32.gmra.mrb[0].mxu0 %v489
    %v930 = vpop.f32.mrb[0].mxu0
    %v931 = vadd.f32 %v762, %v930
    %v932 = vpop.f32.mrb[0].mxu0
    %933 = vmatprep.mubr.f32.mxu0 %v682
    %934 = vmatmul.mubr.f32.gmra.mrb[0].mxu0 %v490
    %v935 = vpop.f32.mrb[0].mxu0
    %v936 = vadd.f32 %v762, %v935
    %v937 = vpop.f32.mrb[0].mxu0
    %938 = vmatprep.mubr.f32.mxu0 %v683
    %939 = vmatmul.mubr.f32.gmra.mrb[0].mxu0 %v491
    %v940 = vpop.f32.mrb[0].mxu0
    %v941 = vadd.f32 %v762, %v940
    %v942 = vpop.f32.mrb[0].mxu0
    %943 = vmatprep.mubr.f32.mxu0 %v684
    %944 = vmatmul.mubr.f32.gmra.mrb[0].mxu0 %v492
    %v945 = vpop.f32.mrb[0].mxu0
    %v946 = vadd.f32 %v762, %v945
    %v947 = vpop.f32.mrb[0].mxu0
    %948 = vmatprep.mubr.f32.mxu0 %v685
    %949 = vmatmul.mubr.f32.gmra.mrb[0].mxu0 %v493
    %v950 = vpop.f32.mrb[0].mxu0
    %v951 = vadd.f32 %v762, %v950
    %v952 = vpop.f32.mrb[0].mxu0
    %953 = vmatprep.mubr.f32.mxu0 %v686
    %954 = vmatmul.mubr.f32.gmra.mrb[0].mxu0 %v494
    %v955 = vpop.f32.mrb[0].mxu0
    %v956 = vadd.f32 %v762, %v955
    %v957 = vpop.f32.mrb[0].mxu0
    %958 = vmatprep.mubr.f32.mxu0 %v687
    %959 = vmatmul.mubr.f32.gmra.mrb[0].mxu0 %v495
    %v960 = vpop.f32.mrb[0].mxu0
    %v961 = vadd.f32 %v762, %v960
    %v962 = vpop.f32.mrb[0].mxu0
    %963 = vmatprep.mubr.f32.mxu0 %v688
    %964 = vmatmul.mubr.f32.gmra.mrb[0].mxu0 %v496
    %v965 = vpop.f32.mrb[0].mxu0
    %v966 = vadd.f32 %v762, %v965
    %v967 = vpop.f32.mrb[0].mxu0
    %968 = vmatprep.mubr.f32.mxu0 %v689
    %969 = vmatmul.mubr.f32.gmra.mrb[0].mxu0 %v497
    %v970 = vpop.f32.mrb[0].mxu0
    %v971 = vadd.f32 %v762, %v970
    %v972 = vpop.f32.mrb[0].mxu0
    %973 = vmatprep.mubr.f32.mxu0 %v690
    %974 = vmatmul.mubr.f32.gmra.mrb[0].mxu0 %v498
    %v975 = vpop.f32.mrb[0].mxu0
    %v976 = vadd.f32 %v762, %v975
    %v977 = vpop.f32.mrb[0].mxu0
    %978 = vmatprep.mubr.f32.mxu0 %v691
    %979 = vmatmul.mubr.f32.gmra.mrb[0].mxu0 %v499
    %v980 = vpop.f32.mrb[0].mxu0
    %v981 = vadd.f32 %v762, %v980
    %v982 = vpop.f32.mrb[0].mxu0
    %983 = vmatprep.mubr.f32.mxu0 %v692
    %984 = vmatmul.mubr.f32.gmra.mrb[0].mxu0 %v500
    %v985 = vpop.f32.mrb[0].mxu0
    %v986 = vadd.f32 %v762, %v985
    %v987 = vpop.f32.mrb[0].mxu0
    %988 = vdwg.mxu0
    %v989 = vmax.f32 %v831, 0.0
    %v990 = vmax.f32 %v836, 0.0
    %v991 = vmax.f32 %v841, 0.0
    %v992 = vmax.f32 %v846, 0.0
    %v993 = vmax.f32 %v851, 0.0
    %v994 = vmax.f32 %v856, 0.0
    %v995 = vmax.f32 %v861, 0.0
    %v996 = vmax.f32 %v866, 0.0
    %v997 = vmax.f32 %v871, 0.0
    %v998 = vmax.f32 %v876, 0.0
    %v999 = vmax.f32 %v881, 0.0
    %v1000 = vmax.f32 %v886, 0.0
    %v1001 = vmax.f32 %v891, 0.0
    %v1002 = vmax.f32 %v896, 0.0
    %v1003 = vmax.f32 %v901, 0.0
    %v1004 = vmax.f32 %v906, 0.0
    %v1005 = vmax.f32 %v911, 0.0
    %v1006 = vmax.f32 %v916, 0.0
    %v1007 = vmax.f32 %v921, 0.0
    %v1008 = vmax.f32 %v926, 0.0
    %v1009 = vmax.f32 %v931, 0.0
    %v1010 = vmax.f32 %v936, 0.0
    %v1011 = vmax.f32 %v941, 0.0
    %v1012 = vmax.f32 %v946, 0.0
    %v1013 = vmax.f32 %v951, 0.0
    %v1014 = vmax.f32 %v956, 0.0
    %v1015 = vmax.f32 %v961, 0.0
    %v1016 = vmax.f32 %v966, 0.0
    %v1017 = vmax.f32 %v971, 0.0
    %v1018 = vmax.f32 %v976, 0.0
    %v1019 = vmax.f32 %v981, 0.0
    %v1020 = vmax.f32 %v986, 0.0
    %v1021 = vld [vmem:[#allocation9] sm:$0xff]
    %v1022 = vld [vmem:[#allocation9 + $0x8] sm:$0xff]
    %v1023 = vld [vmem:[#allocation9 + $0x10] sm:$0xff]
    %v1024 = vld [vmem:[#allocation9 + $0x18] sm:$0xff]
    %v1025 = vld [vmem:[#allocation9 + $0x20] sm:$0xff]
    %v1026 = vld [vmem:[#allocation9 + $0x28] sm:$0xff]
    %v1027 = vld [vmem:[#allocation9 + $0x30] sm:$0xff]
    %v1028 = vld [vmem:[#allocation9 + $0x38] sm:$0xff]
    %v1029 = vld [vmem:[#allocation9 + $0x40] sm:$0xff]
    %v1030 = vld [vmem:[#allocation9 + $0x48] sm:$0xff]
    %v1031 = vld [vmem:[#allocation9 + $0x50] sm:$0xff]
    %v1032 = vld [vmem:[#allocation9 + $0x58] sm:$0xff]
    %v1033 = vld [vmem:[#allocation9 + $0x60] sm:$0xff]
    %v1034 = vld [vmem:[#allocation9 + $0x68] sm:$0xff]
    %v1035 = vld [vmem:[#allocation9 + $0x70] sm:$0xff]
    %v1036 = vld [vmem:[#allocation9 + $0x78] sm:$0xff]
    %v1037 = vld [vmem:[%s6] sm:$0x1]
    %v1039 = vlaneseq
    %v1040 = vshrl.u32 %v1039, 7
    %v1041 = vsub.s32 0, %v1040
    %v1042 = vrot.slane %v1037, %v1041
    %1044 = vmatprep.subr.mxu0 0.0
    %1045 = vmatpush1.msra.mxu0 %v1021
    %1046 = vmatprep.subr.mxu0 0.0
    %1047 = vmatpush1.msra.mxu0 %v1022
    %1048 = vmatprep.subr.mxu0 0.0
    %1049 = vmatpush1.msra.mxu0 %v1023
    %1050 = vmatprep.subr.mxu0 0.0
    %1051 = vmatpush1.msra.mxu0 %v1024
    %1052 = vmatprep.subr.mxu0 0.0
    %1053 = vmatpush1.msra.mxu0 %v1025
    %1054 = vmatprep.subr.mxu0 0.0
    %1055 = vmatpush1.msra.mxu0 %v1026
    %1056 = vmatprep.subr.mxu0 0.0
    %1057 = vmatpush1.msra.mxu0 %v1027
    %1058 = vmatprep.subr.mxu0 0.0
    %1059 = vmatpush1.msra.mxu0 %v1028
    %1060 = vmatprep.subr.mxu0 0.0
    %1061 = vmatpush1.msra.mxu0 %v1029
    %1062 = vmatprep.subr.mxu0 0.0
    %1063 = vmatpush1.msra.mxu0 %v1030
    %1064 = vmatprep.subr.mxu0 0.0
    %1065 = vmatpush1.msra.mxu0 %v1031
    %1066 = vmatprep.subr.mxu0 0.0
    %1067 = vmatpush1.msra.mxu0 %v1032
    %1068 = vmatprep.subr.mxu0 0.0
    %1069 = vmatpush1.msra.mxu0 %v1033
    %1070 = vmatprep.subr.mxu0 0.0
    %1071 = vmatpush1.msra.mxu0 %v1034
    %1072 = vmatprep.subr.mxu0 0.0
    %1073 = vmatpush1.msra.mxu0 %v1035
    %1074 = vmatprep.subr.mxu0 0.0
    %1075 = vmatpush1.msra.mxu0 %v1036
    %1076 = vmatprep.subr.mxu0 0.0
    %1077 = vmatpush1.msra.mxu0 0.0
    %1078 = vmatprep.subr.mxu0 0.0
    %1079 = vmatpush1.msra.mxu0 0.0
    %1080 = vmatprep.subr.mxu0 0.0
    %1081 = vmatpush1.msra.mxu0 0.0
    %1082 = vmatprep.subr.mxu0 0.0
    %1083 = vmatpush1.msra.mxu0 0.0
    %1084 = vmatprep.subr.mxu0 0.0
    %1085 = vmatpush1.msra.mxu0 0.0
    %1086 = vmatprep.subr.mxu0 0.0
    %1087 = vmatpush1.msra.mxu0 0.0
    %1088 = vmatprep.subr.mxu0 0.0
    %1089 = vmatpush1.msra.mxu0 0.0
    %1090 = vmatprep.subr.mxu0 0.0
    %1091 = vmatpush1.msra.mxu0 0.0
    %1092 = vmatprep.subr.mxu0 0.0
    %1093 = vmatpush1.msra.mxu0 0.0
    %1094 = vmatprep.subr.mxu0 0.0
    %1095 = vmatpush1.msra.mxu0 0.0
    %1096 = vmatprep.subr.mxu0 0.0
    %1097 = vmatpush1.msra.mxu0 0.0
    %1098 = vmatprep.subr.mxu0 0.0
    %1099 = vmatpush1.msra.mxu0 0.0
    %1100 = vmatprep.subr.mxu0 0.0
    %1101 = vmatpush1.msra.mxu0 0.0
    %1102 = vmatprep.subr.mxu0 0.0
    %1103 = vmatpush1.msra.mxu0 0.0
    %1104 = vmatprep.subr.mxu0 0.0
    %1105 = vmatpush1.msra.mxu0 0.0
    %1106 = vmatprep.subr.mxu0 0.0
    %1107 = vmatpush1.msra.mxu0 0.0
    %1108 = vmatprep.mubr.f32.mxu0 0.0
    %1109 = vmatmul.mubr.f32.gmra.mrb[0].mxu0 %v989
    %v1110 = vpop.f32.mrb[0].mxu0
    %v1111 = vadd.f32 %v1042, %v1110
    %v1112 = vpop.f32.mrb[0].mxu0
    %1113 = vmatprep.mubr.f32.mxu0 0.0
    %1114 = vmatmul.mubr.f32.gmra.mrb[0].mxu0 %v990
    %v1115 = vpop.f32.mrb[0].mxu0
    %v1116 = vadd.f32 %v1042, %v1115
    %v1117 = vpop.f32.mrb[0].mxu0
    %1118 = vmatprep.mubr.f32.mxu0 0.0
    %1119 = vmatmul.mubr.f32.gmra.mrb[0].mxu0 %v991
    %v1120 = vpop.f32.mrb[0].mxu0
    %v1121 = vadd.f32 %v1042, %v1120
    %v1122 = vpop.f32.mrb[0].mxu0
    %1123 = vmatprep.mubr.f32.mxu0 0.0
    %1124 = vmatmul.mubr.f32.gmra.mrb[0].mxu0 %v992
    %v1125 = vpop.f32.mrb[0].mxu0
    %v1126 = vadd.f32 %v1042, %v1125
    %v1127 = vpop.f32.mrb[0].mxu0
    %1128 = vmatprep.mubr.f32.mxu0 0.0
    %1129 = vmatmul.mubr.f32.gmra.mrb[0].mxu0 %v993
    %v1130 = vpop.f32.mrb[0].mxu0
    %v1131 = vadd.f32 %v1042, %v1130
    %v1132 = vpop.f32.mrb[0].mxu0
    %1133 = vmatprep.mubr.f32.mxu0 0.0
    %1134 = vmatmul.mubr.f32.gmra.mrb[0].mxu0 %v994
    %v1135 = vpop.f32.mrb[0].mxu0
    %v1136 = vadd.f32 %v1042, %v1135
    %v1137 = vpop.f32.mrb[0].mxu0
    %1138 = vmatprep.mubr.f32.mxu0 0.0
    %1139 = vmatmul.mubr.f32.gmra.mrb[0].mxu0 %v995
    %v1140 = vpop.f32.mrb[0].mxu0
    %v1141 = vadd.f32 %v1042, %v1140
    %v1142 = vpop.f32.mrb[0].mxu0
    %1143 = vmatprep.mubr.f32.mxu0 0.0
    %1144 = vmatmul.mubr.f32.gmra.mrb[0].mxu0 %v996
    %v1145 = vpop.f32.mrb[0].mxu0
    %v1146 = vadd.f32 %v1042, %v1145
    %v1147 = vpop.f32.mrb[0].mxu0
    %1148 = vmatprep.mubr.f32.mxu0 0.0
    %1149 = vmatmul.mubr.f32.gmra.mrb[0].mxu0 %v997
    %v1150 = vpop.f32.mrb[0].mxu0
    %v1151 = vadd.f32 %v1042, %v1150
    %v1152 = vpop.f32.mrb[0].mxu0
    %1153 = vmatprep.mubr.f32.mxu0 0.0
    %1154 = vmatmul.mubr.f32.gmra.mrb[0].mxu0 %v998
    %v1155 = vpop.f32.mrb[0].mxu0
    %v1156 = vadd.f32 %v1042, %v1155
    %v1157 = vpop.f32.mrb[0].mxu0
    %1158 = vmatprep.mubr.f32.mxu0 0.0
    %1159 = vmatmul.mubr.f32.gmra.mrb[0].mxu0 %v999
    %v1160 = vpop.f32.mrb[0].mxu0
    %v1161 = vadd.f32 %v1042, %v1160
    %v1162 = vpop.f32.mrb[0].mxu0
    %1163 = vmatprep.mubr.f32.mxu0 0.0
    %1164 = vmatmul.mubr.f32.gmra.mrb[0].mxu0 %v1000
    %v1165 = vpop.f32.mrb[0].mxu0
    %v1166 = vadd.f32 %v1042, %v1165
    %v1167 = vpop.f32.mrb[0].mxu0
    %1168 = vmatprep.mubr.f32.mxu0 0.0
    %1169 = vmatmul.mubr.f32.gmra.mrb[0].mxu0 %v1001
    %v1170 = vpop.f32.mrb[0].mxu0
    %v1171 = vadd.f32 %v1042, %v1170
    %v1172 = vpop.f32.mrb[0].mxu0
    %1173 = vmatprep.mubr.f32.mxu0 0.0
    %1174 = vmatmul.mubr.f32.gmra.mrb[0].mxu0 %v1002
    %v1175 = vpop.f32.mrb[0].mxu0
    %v1176 = vadd.f32 %v1042, %v1175
    %v1177 = vpop.f32.mrb[0].mxu0
    %1178 = vmatprep.mubr.f32.mxu0 0.0
    %1179 = vmatmul.mubr.f32.gmra.mrb[0].mxu0 %v1003
    %v1180 = vpop.f32.mrb[0].mxu0
    %v1181 = vadd.f32 %v1042, %v1180
    %v1182 = vpop.f32.mrb[0].mxu0
    %1183 = vmatprep.mubr.f32.mxu0 0.0
    %1184 = vmatmul.mubr.f32.gmra.mrb[0].mxu0 %v1004
    %v1185 = vpop.f32.mrb[0].mxu0
    %v1186 = vadd.f32 %v1042, %v1185
    %v1187 = vpop.f32.mrb[0].mxu0
    %1188 = vmatprep.mubr.f32.mxu0 0.0
    %1189 = vmatmul.mubr.f32.gmra.mrb[0].mxu0 %v1005
    %v1190 = vpop.f32.mrb[0].mxu0
    %v1191 = vadd.f32 %v1042, %v1190
    %v1192 = vpop.f32.mrb[0].mxu0
    %1193 = vmatprep.mubr.f32.mxu0 0.0
    %1194 = vmatmul.mubr.f32.gmra.mrb[0].mxu0 %v1006
    %v1195 = vpop.f32.mrb[0].mxu0
    %v1196 = vadd.f32 %v1042, %v1195
    %v1197 = vpop.f32.mrb[0].mxu0
    %1198 = vmatprep.mubr.f32.mxu0 0.0
    %1199 = vmatmul.mubr.f32.gmra.mrb[0].mxu0 %v1007
    %v1200 = vpop.f32.mrb[0].mxu0
    %v1201 = vadd.f32 %v1042, %v1200
    %v1202 = vpop.f32.mrb[0].mxu0
    %1203 = vmatprep.mubr.f32.mxu0 0.0
    %1204 = vmatmul.mubr.f32.gmra.mrb[0].mxu0 %v1008
    %v1205 = vpop.f32.mrb[0].mxu0
    %v1206 = vadd.f32 %v1042, %v1205
    %v1207 = vpop.f32.mrb[0].mxu0
    %1208 = vmatprep.mubr.f32.mxu0 0.0
    %1209 = vmatmul.mubr.f32.gmra.mrb[0].mxu0 %v1009
    %v1210 = vpop.f32.mrb[0].mxu0
    %v1211 = vadd.f32 %v1042, %v1210
    %v1212 = vpop.f32.mrb[0].mxu0
    %1213 = vmatprep.mubr.f32.mxu0 0.0
    %1214 = vmatmul.mubr.f32.gmra.mrb[0].mxu0 %v1010
    %v1215 = vpop.f32.mrb[0].mxu0
    %v1216 = vadd.f32 %v1042, %v1215
    %v1217 = vpop.f32.mrb[0].mxu0
    %1218 = vmatprep.mubr.f32.mxu0 0.0
    %1219 = vmatmul.mubr.f32.gmra.mrb[0].mxu0 %v1011
    %v1220 = vpop.f32.mrb[0].mxu0
    %v1221 = vadd.f32 %v1042, %v1220
    %v1222 = vpop.f32.mrb[0].mxu0
    %1223 = vmatprep.mubr.f32.mxu0 0.0
    %1224 = vmatmul.mubr.f32.gmra.mrb[0].mxu0 %v1012
    %v1225 = vpop.f32.mrb[0].mxu0
    %v1226 = vadd.f32 %v1042, %v1225
    %v1227 = vpop.f32.mrb[0].mxu0
    %1228 = vmatprep.mubr.f32.mxu0 0.0
    %1229 = vmatmul.mubr.f32.gmra.mrb[0].mxu0 %v1013
    %v1230 = vpop.f32.mrb[0].mxu0
    %v1231 = vadd.f32 %v1042, %v1230
    %v1232 = vpop.f32.mrb[0].mxu0
    %1233 = vmatprep.mubr.f32.mxu0 0.0
    %1234 = vmatmul.mubr.f32.gmra.mrb[0].mxu0 %v1014
    %v1235 = vpop.f32.mrb[0].mxu0
    %v1236 = vadd.f32 %v1042, %v1235
    %v1237 = vpop.f32.mrb[0].mxu0
    %1238 = vmatprep.mubr.f32.mxu0 0.0
    %1239 = vmatmul.mubr.f32.gmra.mrb[0].mxu0 %v1015
    %v1240 = vpop.f32.mrb[0].mxu0
    %v1241 = vadd.f32 %v1042, %v1240
    %v1242 = vpop.f32.mrb[0].mxu0
    %1243 = vmatprep.mubr.f32.mxu0 0.0
    %1244 = vmatmul.mubr.f32.gmra.mrb[0].mxu0 %v1016
    %v1245 = vpop.f32.mrb[0].mxu0
    %v1246 = vadd.f32 %v1042, %v1245
    %v1247 = vpop.f32.mrb[0].mxu0
    %1248 = vmatprep.mubr.f32.mxu0 0.0
    %1249 = vmatmul.mubr.f32.gmra.mrb[0].mxu0 %v1017
    %v1250 = vpop.f32.mrb[0].mxu0
    %v1251 = vadd.f32 %v1042, %v1250
    %v1252 = vpop.f32.mrb[0].mxu0
    %1253 = vmatprep.mubr.f32.mxu0 0.0
    %1254 = vmatmul.mubr.f32.gmra.mrb[0].mxu0 %v1018
    %v1255 = vpop.f32.mrb[0].mxu0
    %v1256 = vadd.f32 %v1042, %v1255
    %v1257 = vpop.f32.mrb[0].mxu0
    %1258 = vmatprep.mubr.f32.mxu0 0.0
    %1259 = vmatmul.mubr.f32.gmra.mrb[0].mxu0 %v1019
    %v1260 = vpop.f32.mrb[0].mxu0
    %v1261 = vadd.f32 %v1042, %v1260
    %v1262 = vpop.f32.mrb[0].mxu0
    %1263 = vmatprep.mubr.f32.mxu0 0.0
    %1264 = vmatmul.mubr.f32.gmra.mrb[0].mxu0 %v1020
    %v1265 = vpop.f32.mrb[0].mxu0
    %v1266 = vadd.f32 %v1042, %v1265
    %v1267 = vpop.f32.mrb[0].mxu0
    %1268 = vdwg.mxu0
    %v1269 = vmax.f32 %v1111, 0.0
    %v1270 = vmax.f32 %v1116, 0.0
    %v1271 = vmax.f32 %v1121, 0.0
    %v1272 = vmax.f32 %v1126, 0.0
    %v1273 = vmax.f32 %v1131, 0.0
    %v1274 = vmax.f32 %v1136, 0.0
    %v1275 = vmax.f32 %v1141, 0.0
    %v1276 = vmax.f32 %v1146, 0.0
    %v1277 = vmax.f32 %v1151, 0.0
    %v1278 = vmax.f32 %v1156, 0.0
    %v1279 = vmax.f32 %v1161, 0.0
    %v1280 = vmax.f32 %v1166, 0.0
    %v1281 = vmax.f32 %v1171, 0.0
    %v1282 = vmax.f32 %v1176, 0.0
    %v1283 = vmax.f32 %v1181, 0.0
    %v1284 = vmax.f32 %v1186, 0.0
    %v1285 = vmax.f32 %v1191, 0.0
    %v1286 = vmax.f32 %v1196, 0.0
    %v1287 = vmax.f32 %v1201, 0.0
    %v1288 = vmax.f32 %v1206, 0.0
    %v1289 = vmax.f32 %v1211, 0.0
    %v1290 = vmax.f32 %v1216, 0.0
    %v1291 = vmax.f32 %v1221, 0.0
    %v1292 = vmax.f32 %v1226, 0.0
    %v1293 = vmax.f32 %v1231, 0.0
    %v1294 = vmax.f32 %v1236, 0.0
    %v1295 = vmax.f32 %v1241, 0.0
    %v1296 = vmax.f32 %v1246, 0.0
    %v1297 = vmax.f32 %v1251, 0.0
    %v1298 = vmax.f32 %v1256, 0.0
    %v1299 = vmax.f32 %v1261, 0.0
    %v1300 = vmax.f32 %v1266, 0.0
    %v1301 = vld [vmem:[#allocation11] sm:$0xff]
    %v1302 = vld [vmem:[#allocation11 + $0x8] sm:$0xff]
    %v1303 = vld [vmem:[#allocation11 + $0x10] sm:$0xff]
    %v1304 = vld [vmem:[#allocation11 + $0x18] sm:$0xff]
    %v1305 = vld [vmem:[#allocation11 + $0x20] sm:$0xff]
    %v1306 = vld [vmem:[#allocation11 + $0x28] sm:$0xff]
    %v1307 = vld [vmem:[#allocation11 + $0x30] sm:$0xff]
    %v1308 = vld [vmem:[#allocation11 + $0x38] sm:$0xff]
    %v1309 = vld [vmem:[#allocation11 + $0x40] sm:$0xff]
    %v1310 = vld [vmem:[#allocation11 + $0x48] sm:$0xff]
    %v1311 = vld [vmem:[#allocation11 + $0x50] sm:$0xff]
    %v1312 = vld [vmem:[#allocation11 + $0x58] sm:$0xff]
    %v1313 = vld [vmem:[#allocation11 + $0x60] sm:$0xff]
    %v1314 = vld [vmem:[#allocation11 + $0x68] sm:$0xff]
    %v1315 = vld [vmem:[#allocation11 + $0x70] sm:$0xff]
    %v1316 = vld [vmem:[#allocation11 + $0x78] sm:$0xff]
    %v1317 = vld [vmem:[#allocation11 + $0x80] sm:$0xff]
    %v1318 = vld [vmem:[#allocation11 + $0x88] sm:$0xff]
    %v1319 = vld [vmem:[#allocation11 + $0x90] sm:$0xff]
    %v1320 = vld [vmem:[#allocation11 + $0x98] sm:$0xff]
    %v1321 = vld [vmem:[#allocation11 + $0xa0] sm:$0xff]
    %v1322 = vld [vmem:[#allocation11 + $0xa8] sm:$0xff]
    %v1323 = vld [vmem:[#allocation11 + $0xb0] sm:$0xff]
    %v1324 = vld [vmem:[#allocation11 + $0xb8] sm:$0xff]
    %v1325 = vld [vmem:[#allocation11 + $0xc0] sm:$0xff]
    %v1326 = vld [vmem:[#allocation11 + $0xc8] sm:$0xff]
    %v1327 = vld [vmem:[#allocation11 + $0xd0] sm:$0xff]
    %v1328 = vld [vmem:[#allocation11 + $0xd8] sm:$0xff]
    %v1329 = vld [vmem:[#allocation11 + $0xe0] sm:$0xff]
    %v1330 = vld [vmem:[#allocation11 + $0xe8] sm:$0xff]
    %v1331 = vld [vmem:[#allocation11 + $0xf0] sm:$0xff]
    %v1332 = vld [vmem:[#allocation11 + $0xf8] sm:$0xff]
    %v1333 = vld [vmem:[%s8] sm:$0x1]
    %v1335 = vlaneseq
    %v1336 = vshrl.u32 %v1335, 7
    %v1337 = vsub.s32 0, %v1336
    %v1338 = vrot.slane %v1333, %v1337
    %1340 = vmatprep.subr.mxu0 0.0
    %1341 = vmatpush1.msra.mxu0 %v1301
    %1342 = vmatprep.subr.mxu0 0.0
    %1343 = vmatpush1.msra.mxu0 %v1302
    %1344 = vmatprep.subr.mxu0 0.0
    %1345 = vmatpush1.msra.mxu0 %v1303
    %1346 = vmatprep.subr.mxu0 0.0
    %1347 = vmatpush1.msra.mxu0 %v1304
    %1348 = vmatprep.subr.mxu0 0.0
    %1349 = vmatpush1.msra.mxu0 %v1305
    %1350 = vmatprep.subr.mxu0 0.0
    %1351 = vmatpush1.msra.mxu0 %v1306
    %1352 = vmatprep.subr.mxu0 0.0
    %1353 = vmatpush1.msra.mxu0 %v1307
    %1354 = vmatprep.subr.mxu0 0.0
    %1355 = vmatpush1.msra.mxu0 %v1308
    %1356 = vmatprep.subr.mxu0 0.0
    %1357 = vmatpush1.msra.mxu0 %v1309
    %1358 = vmatprep.subr.mxu0 0.0
    %1359 = vmatpush1.msra.mxu0 %v1310
    %1360 = vmatprep.subr.mxu0 0.0
    %1361 = vmatpush1.msra.mxu0 %v1311
    %1362 = vmatprep.subr.mxu0 0.0
    %1363 = vmatpush1.msra.mxu0 %v1312
    %1364 = vmatprep.subr.mxu0 0.0
    %1365 = vmatpush1.msra.mxu0 %v1313
    %1366 = vmatprep.subr.mxu0 0.0
    %1367 = vmatpush1.msra.mxu0 %v1314
    %1368 = vmatprep.subr.mxu0 0.0
    %1369 = vmatpush1.msra.mxu0 %v1315
    %1370 = vmatprep.subr.mxu0 0.0
    %1371 = vmatpush1.msra.mxu0 %v1316
    %1372 = vmatprep.subr.mxu0 0.0
    %1373 = vmatpush1.msra.mxu0 %v1317
    %1374 = vmatprep.subr.mxu0 0.0
    %1375 = vmatpush1.msra.mxu0 %v1318
    %1376 = vmatprep.subr.mxu0 0.0
    %1377 = vmatpush1.msra.mxu0 %v1319
    %1378 = vmatprep.subr.mxu0 0.0
    %1379 = vmatpush1.msra.mxu0 %v1320
    %1380 = vmatprep.subr.mxu0 0.0
    %1381 = vmatpush1.msra.mxu0 %v1321
    %1382 = vmatprep.subr.mxu0 0.0
    %1383 = vmatpush1.msra.mxu0 %v1322
    %1384 = vmatprep.subr.mxu0 0.0
    %1385 = vmatpush1.msra.mxu0 %v1323
    %1386 = vmatprep.subr.mxu0 0.0
    %1387 = vmatpush1.msra.mxu0 %v1324
    %1388 = vmatprep.subr.mxu0 0.0
    %1389 = vmatpush1.msra.mxu0 %v1325
    %1390 = vmatprep.subr.mxu0 0.0
    %1391 = vmatpush1.msra.mxu0 %v1326
    %1392 = vmatprep.subr.mxu0 0.0
    %1393 = vmatpush1.msra.mxu0 %v1327
    %1394 = vmatprep.subr.mxu0 0.0
    %1395 = vmatpush1.msra.mxu0 %v1328
    %1396 = vmatprep.subr.mxu0 0.0
    %1397 = vmatpush1.msra.mxu0 %v1329
    %1398 = vmatprep.subr.mxu0 0.0
    %1399 = vmatpush1.msra.mxu0 %v1330
    %1400 = vmatprep.subr.mxu0 0.0
    %1401 = vmatpush1.msra.mxu0 %v1331
    %1402 = vmatprep.subr.mxu0 0.0
    %1403 = vmatpush1.msra.mxu0 %v1332
    %1404 = vmatprep.mubr.f32.mxu0 %v1269
    %1405 = vmatmul.mubr.f32.gmra.mrb[0].mxu0 %v693
    %v1406 = vpop.f32.mrb[0].mxu0
    %v1407 = vadd.f32 %v1338, %v1406
    %v1408 = vpop.f32.mrb[0].mxu0
    %1409 = vmatprep.mubr.f32.mxu0 %v1270
    %1410 = vmatmul.mubr.f32.gmra.mrb[0].mxu0 %v694
    %v1411 = vpop.f32.mrb[0].mxu0
    %v1412 = vadd.f32 %v1338, %v1411
    %v1413 = vpop.f32.mrb[0].mxu0
    %1414 = vmatprep.mubr.f32.mxu0 %v1271
    %1415 = vmatmul.mubr.f32.gmra.mrb[0].mxu0 %v695
    %v1416 = vpop.f32.mrb[0].mxu0
    %v1417 = vadd.f32 %v1338, %v1416
    %v1418 = vpop.f32.mrb[0].mxu0
    %1419 = vmatprep.mubr.f32.mxu0 %v1272
    %1420 = vmatmul.mubr.f32.gmra.mrb[0].mxu0 %v696
    %v1421 = vpop.f32.mrb[0].mxu0
    %v1422 = vadd.f32 %v1338, %v1421
    %v1423 = vpop.f32.mrb[0].mxu0
    %1424 = vmatprep.mubr.f32.mxu0 %v1273
    %1425 = vmatmul.mubr.f32.gmra.mrb[0].mxu0 %v697
    %v1426 = vpop.f32.mrb[0].mxu0
    %v1427 = vadd.f32 %v1338, %v1426
    %v1428 = vpop.f32.mrb[0].mxu0
    %1429 = vmatprep.mubr.f32.mxu0 %v1274
    %1430 = vmatmul.mubr.f32.gmra.mrb[0].mxu0 %v698
    %v1431 = vpop.f32.mrb[0].mxu0
    %v1432 = vadd.f32 %v1338, %v1431
    %v1433 = vpop.f32.mrb[0].mxu0
    %1434 = vmatprep.mubr.f32.mxu0 %v1275
    %1435 = vmatmul.mubr.f32.gmra.mrb[0].mxu0 %v699
    %v1436 = vpop.f32.mrb[0].mxu0
    %v1437 = vadd.f32 %v1338, %v1436
    %v1438 = vpop.f32.mrb[0].mxu0
    %1439 = vmatprep.mubr.f32.mxu0 %v1276
    %1440 = vmatmul.mubr.f32.gmra.mrb[0].mxu0 %v700
    %v1441 = vpop.f32.mrb[0].mxu0
    %v1442 = vadd.f32 %v1338, %v1441
    %v1443 = vpop.f32.mrb[0].mxu0
    %1444 = vmatprep.mubr.f32.mxu0 %v1277
    %1445 = vmatmul.mubr.f32.gmra.mrb[0].mxu0 %v701
    %v1446 = vpop.f32.mrb[0].mxu0
    %v1447 = vadd.f32 %v1338, %v1446
    %v1448 = vpop.f32.mrb[0].mxu0
    %1449 = vmatprep.mubr.f32.mxu0 %v1278
    %1450 = vmatmul.mubr.f32.gmra.mrb[0].mxu0 %v702
    %v1451 = vpop.f32.mrb[0].mxu0
    %v1452 = vadd.f32 %v1338, %v1451
    %v1453 = vpop.f32.mrb[0].mxu0
    %1454 = vmatprep.mubr.f32.mxu0 %v1279
    %1455 = vmatmul.mubr.f32.gmra.mrb[0].mxu0 %v703
    %v1456 = vpop.f32.mrb[0].mxu0
    %v1457 = vadd.f32 %v1338, %v1456
    %v1458 = vpop.f32.mrb[0].mxu0
    %1459 = vmatprep.mubr.f32.mxu0 %v1280
    %1460 = vmatmul.mubr.f32.gmra.mrb[0].mxu0 %v704
    %v1461 = vpop.f32.mrb[0].mxu0
    %v1462 = vadd.f32 %v1338, %v1461
    %v1463 = vpop.f32.mrb[0].mxu0
    %1464 = vmatprep.mubr.f32.mxu0 %v1281
    %1465 = vmatmul.mubr.f32.gmra.mrb[0].mxu0 %v705
    %v1466 = vpop.f32.mrb[0].mxu0
    %v1467 = vadd.f32 %v1338, %v1466
    %v1468 = vpop.f32.mrb[0].mxu0
    %1469 = vmatprep.mubr.f32.mxu0 %v1282
    %1470 = vmatmul.mubr.f32.gmra.mrb[0].mxu0 %v706
    %v1471 = vpop.f32.mrb[0].mxu0
    %v1472 = vadd.f32 %v1338, %v1471
    %v1473 = vpop.f32.mrb[0].mxu0
    %1474 = vmatprep.mubr.f32.mxu0 %v1283
    %1475 = vmatmul.mubr.f32.gmra.mrb[0].mxu0 %v707
    %v1476 = vpop.f32.mrb[0].mxu0
    %v1477 = vadd.f32 %v1338, %v1476
    %v1478 = vpop.f32.mrb[0].mxu0
    %1479 = vmatprep.mubr.f32.mxu0 %v1284
    %1480 = vmatmul.mubr.f32.gmra.mrb[0].mxu0 %v708
    %v1481 = vpop.f32.mrb[0].mxu0
    %v1482 = vadd.f32 %v1338, %v1481
    %v1483 = vpop.f32.mrb[0].mxu0
    %1484 = vmatprep.mubr.f32.mxu0 %v1285
    %1485 = vmatmul.mubr.f32.gmra.mrb[0].mxu0 %v709
    %v1486 = vpop.f32.mrb[0].mxu0
    %v1487 = vadd.f32 %v1338, %v1486
    %v1488 = vpop.f32.mrb[0].mxu0
    %1489 = vmatprep.mubr.f32.mxu0 %v1286
    %1490 = vmatmul.mubr.f32.gmra.mrb[0].mxu0 %v710
    %v1491 = vpop.f32.mrb[0].mxu0
    %v1492 = vadd.f32 %v1338, %v1491
    %v1493 = vpop.f32.mrb[0].mxu0
    %1494 = vmatprep.mubr.f32.mxu0 %v1287
    %1495 = vmatmul.mubr.f32.gmra.mrb[0].mxu0 %v711
    %v1496 = vpop.f32.mrb[0].mxu0
    %v1497 = vadd.f32 %v1338, %v1496
    %v1498 = vpop.f32.mrb[0].mxu0
    %1499 = vmatprep.mubr.f32.mxu0 %v1288
    %1500 = vmatmul.mubr.f32.gmra.mrb[0].mxu0 %v712
    %v1501 = vpop.f32.mrb[0].mxu0
    %v1502 = vadd.f32 %v1338, %v1501
    %v1503 = vpop.f32.mrb[0].mxu0
    %1504 = vmatprep.mubr.f32.mxu0 %v1289
    %1505 = vmatmul.mubr.f32.gmra.mrb[0].mxu0 %v713
    %v1506 = vpop.f32.mrb[0].mxu0
    %v1507 = vadd.f32 %v1338, %v1506
    %v1508 = vpop.f32.mrb[0].mxu0
    %1509 = vmatprep.mubr.f32.mxu0 %v1290
    %1510 = vmatmul.mubr.f32.gmra.mrb[0].mxu0 %v714
    %v1511 = vpop.f32.mrb[0].mxu0
    %v1512 = vadd.f32 %v1338, %v1511
    %v1513 = vpop.f32.mrb[0].mxu0
    %1514 = vmatprep.mubr.f32.mxu0 %v1291
    %1515 = vmatmul.mubr.f32.gmra.mrb[0].mxu0 %v715
    %v1516 = vpop.f32.mrb[0].mxu0
    %v1517 = vadd.f32 %v1338, %v1516
    %v1518 = vpop.f32.mrb[0].mxu0
    %1519 = vmatprep.mubr.f32.mxu0 %v1292
    %1520 = vmatmul.mubr.f32.gmra.mrb[0].mxu0 %v716
    %v1521 = vpop.f32.mrb[0].mxu0
    %v1522 = vadd.f32 %v1338, %v1521
    %v1523 = vpop.f32.mrb[0].mxu0
    %1524 = vmatprep.mubr.f32.mxu0 %v1293
    %1525 = vmatmul.mubr.f32.gmra.mrb[0].mxu0 %v717
    %v1526 = vpop.f32.mrb[0].mxu0
    %v1527 = vadd.f32 %v1338, %v1526
    %v1528 = vpop.f32.mrb[0].mxu0
    %1529 = vmatprep.mubr.f32.mxu0 %v1294
    %1530 = vmatmul.mubr.f32.gmra.mrb[0].mxu0 %v718
    %v1531 = vpop.f32.mrb[0].mxu0
    %v1532 = vadd.f32 %v1338, %v1531
    %v1533 = vpop.f32.mrb[0].mxu0
    %1534 = vmatprep.mubr.f32.mxu0 %v1295
    %1535 = vmatmul.mubr.f32.gmra.mrb[0].mxu0 %v719
    %v1536 = vpop.f32.mrb[0].mxu0
    %v1537 = vadd.f32 %v1338, %v1536
    %v1538 = vpop.f32.mrb[0].mxu0
    %1539 = vmatprep.mubr.f32.mxu0 %v1296
    %1540 = vmatmul.mubr.f32.gmra.mrb[0].mxu0 %v720
    %v1541 = vpop.f32.mrb[0].mxu0
    %v1542 = vadd.f32 %v1338, %v1541
    %v1543 = vpop.f32.mrb[0].mxu0
    %1544 = vmatprep.mubr.f32.mxu0 %v1297
    %1545 = vmatmul.mubr.f32.gmra.mrb[0].mxu0 %v721
    %v1546 = vpop.f32.mrb[0].mxu0
    %v1547 = vadd.f32 %v1338, %v1546
    %v1548 = vpop.f32.mrb[0].mxu0
    %1549 = vmatprep.mubr.f32.mxu0 %v1298
    %1550 = vmatmul.mubr.f32.gmra.mrb[0].mxu0 %v722
    %v1551 = vpop.f32.mrb[0].mxu0
    %v1552 = vadd.f32 %v1338, %v1551
    %v1553 = vpop.f32.mrb[0].mxu0
    %1554 = vmatprep.mubr.f32.mxu0 %v1299
    %1555 = vmatmul.mubr.f32.gmra.mrb[0].mxu0 %v723
    %v1556 = vpop.f32.mrb[0].mxu0
    %v1557 = vadd.f32 %v1338, %v1556
    %v1558 = vpop.f32.mrb[0].mxu0
    %1559 = vmatprep.mubr.f32.mxu0 %v1300
    %1560 = vmatmul.mubr.f32.gmra.mrb[0].mxu0 %v724
    %v1561 = vpop.f32.mrb[0].mxu0
    %v1562 = vadd.f32 %v1338, %v1561
    %v1563 = vpop.f32.mrb[0].mxu0
    %1564 = vdwg.mxu0
    %1565 = vst [vmem:[#allocation12] sm:$0xff] %v1407
    %1566 = vst [vmem:[#allocation12 + $0x8] sm:$0xff] %v1412
    %1567 = vst [vmem:[#allocation12 + $0x10] sm:$0xff] %v1417
    %1568 = vst [vmem:[#allocation12 + $0x18] sm:$0xff] %v1422
    %1569 = vst [vmem:[#allocation12 + $0x20] sm:$0xff] %v1427
    %1570 = vst [vmem:[#allocation12 + $0x28] sm:$0xff] %v1432
    %1571 = vst [vmem:[#allocation12 + $0x30] sm:$0xff] %v1437
    %1572 = vst [vmem:[#allocation12 + $0x38] sm:$0xff] %v1442
    %1573 = vst [vmem:[#allocation12 + $0x40] sm:$0xff] %v1447
    %1574 = vst [vmem:[#allocation12 + $0x48] sm:$0xff] %v1452
    %1575 = vst [vmem:[#allocation12 + $0x50] sm:$0xff] %v1457
    %1576 = vst [vmem:[#allocation12 + $0x58] sm:$0xff] %v1462
    %1577 = vst [vmem:[#allocation12 + $0x60] sm:$0xff] %v1467
    %1578 = vst [vmem:[#allocation12 + $0x68] sm:$0xff] %v1472
    %1579 = vst [vmem:[#allocation12 + $0x70] sm:$0xff] %v1477
    %1580 = vst [vmem:[#allocation12 + $0x78] sm:$0xff] %v1482
    %1581 = vst [vmem:[#allocation12 + $0x80] sm:$0xff] %v1487
    %1582 = vst [vmem:[#allocation12 + $0x88] sm:$0xff] %v1492
    %1583 = vst [vmem:[#allocation12 + $0x90] sm:$0xff] %v1497
    %1584 = vst [vmem:[#allocation12 + $0x98] sm:$0xff] %v1502
    %1585 = vst [vmem:[#allocation12 + $0xa0] sm:$0xff] %v1507
    %1586 = vst [vmem:[#allocation12 + $0xa8] sm:$0xff] %v1512
    %1587 = vst [vmem:[#allocation12 + $0xb0] sm:$0xff] %v1517
    %1588 = vst [vmem:[#allocation12 + $0xb8] sm:$0xff] %v1522
    %1589 = vst [vmem:[#allocation12 + $0xc0] sm:$0xff] %v1527
    %1590 = vst [vmem:[#allocation12 + $0xc8] sm:$0xff] %v1532
    %1591 = vst [vmem:[#allocation12 + $0xd0] sm:$0xff] %v1537
    %1592 = vst [vmem:[#allocation12 + $0xd8] sm:$0xff] %v1542
    %1593 = vst [vmem:[#allocation12 + $0xe0] sm:$0xff] %v1547
    %1594 = vst [vmem:[#allocation12 + $0xe8] sm:$0xff] %v1552
    %1595 = vst [vmem:[#allocation12 + $0xf0] sm:$0xff] %v1557
    %1596 = vst [vmem:[#allocation12 + $0xf8] sm:$0xff] %v1562
    // Predicated region
    $region53: #{tpu_custom_call.1} parent=1 // pred_check
      _
    $region54: #{tpu_custom_call.1} parent=1 // pred_check_branch
      %1598 = sbr.rel (0) target = $region56
    $region55: #{tpu_custom_call.1} parent=1 // pred_region
      %s1600 = ssub.s32 4096, 4096
      %1601 = vsyncadd [#allocation8], %s1600
      %s1602 = sshll.u32 [#allocation12], 4
      %s1603 = int_to_ptr.vmem [resolvable:$true] %s1602
      %1608 = dma.vmem_to_hbm [thread:$0]  %s1603, 4096, %s9, [#allocation8], 128, 128, 8
    $region56: #{tpu_custom_call.1} parent=1 // pred_fallthru
      _
    // Predicated region
    $region57: #{tpu_custom_call.1} parent=1 // pred_check
      _
    $region58: #{tpu_custom_call.1} parent=1 // pred_check_branch
      %1610 = sbr.rel (0) target = $region60
    $region59: #{tpu_custom_call.1} parent=1 // pred_region
      %1611 = dma.done [#allocation8], 4096
    $region60: #{tpu_custom_call.1} parent=1 // pred_fallthru
      _
    %1612 = vsyncpa [#allocation7], 1
    %1613 = vsyncpa [#allocation10], 1
    %1614 = vsyncpa [#allocation8], 1

</llo_original>
